<compile_context>
chip_gen: v7x
topology: tpu7x:2x2x1
jax: 0.10.0
libtpu: 0.0.40
codegen_flags: <defaults>
</compile_context>

<pallas_src>
import functools

import jax
import jax.numpy as jnp
from jax.experimental import pallas as pl
from jax.experimental.pallas import tpu as pltpu

# Parameter order and bounds exactly as in SACSMAMul.__init__ (dict insertion order).
PARAM_BOUNDS = (
    ("pctim", 0.0, 1.0),
    ("smax", 1.0, 2000.0),
    ("f1", 0.005, 0.995),
    ("f2", 0.005, 0.995),
    ("kuz", 0.0, 1.0),
    ("rexp", 0.0, 7.0),
    ("f3", 0.005, 0.995),
    ("f4", 0.005, 0.995),
    ("pfree", 0.0, 1.0),
    ("klzp", 0.0, 1.0),
    ("klzs", 0.0, 1.0),
)
CONV_ROUTING_BOUNDS = ((0.0, 2.9), (0.0, 6.5))
N_DERIVED = 25  # number of precomputed (hoisted) per-basin parameter planes


def _round_up(x, m):
    return ((x + m - 1) // m) * m


# ----------------------------------------------------------------------------
# Hoisted derived parameters (computed once in plain JAX, outside the kernel).
# ----------------------------------------------------------------------------
def _derive_params(params_raw_last):
    """params_raw_last: [Ngrid, 11, nmul] raw in [0,1] -> [N_DERIVED, nmul, Ngrid] f32."""
    p = {}
    for i, (name, lo, hi) in enumerate(PARAM_BOUNDS):
        p[name] = params_raw_last[:, i, :] * (hi - lo) + lo  # [Ngrid, nmul]

    uztwm = p["f1"] * p["smax"]
    uzfwm = jnp.maximum(p["f2"] * (p["smax"] - uztwm), 0.005 / 4)
    lztwm = jnp.maximum(p["f3"] * (p["smax"] - uztwm - uzfwm), 0.005 / 4)
    lzfwpm = jnp.maximum(p["f4"] * (p["smax"] - uztwm - uzfwm - lztwm), 0.005 / 4)
    lzfwsm = jnp.maximum((1.0 - p["f4"]) * (p["smax"] - uztwm - uzfwm - lztwm), 0.005 / 4)
    pbase = lzfwpm * p["klzp"] + lzfwsm * p["klzs"]
    zden = lzfwsm * p["klzs"] + lzfwpm * p["klzp"]
    zperc = jnp.minimum((lztwm + lzfwsm * (1.0 - p["klzs"])) / zden
                        + lzfwpm * (1.0 - p["klzp"]) / zden, 1e5)
    pw = 1.0 + p["rexp"]
    lz_ps = lzfwpm + lzfwsm

    derived = [
        p["pctim"], uztwm, uzfwm, p["kuz"], pbase, zperc, pw,
        lztwm, lzfwpm, lzfwsm, p["pfree"], p["klzp"], p["klzs"],
        1.0 / uztwm,                       # inv_uztwm
        1.0 / uzfwm,                       # inv_uzfwm
        1.0 / (uztwm + uzfwm),             # inv_uz_sum
        1.0 / (uztwm + 1e-4),              # inv_uztwm_eps
        1.0 / lztwm,                       # inv_lztwm
        1.0 / lzfwpm,                      # inv_lzfwpm
        1.0 / lzfwsm,                      # inv_lzfwsm
        lz_ps,                             # lz_ps_sum
        1.0 / lz_ps,                       # inv_lz_ps
        1.0 / (lz_ps * (lztwm + lz_ps)),   # inv_rl_den
        1.0 / (lztwm + lz_ps + 1e-4),      # inv_lz_cap_eps
        1.0 / (uztwm + lztwm),             # inv_ut_lt
    ]
    stacked = jnp.stack(derived, axis=0)                    # [N_DERIVED, Ngrid, nmul]
    return jnp.transpose(stacked, (0, 2, 1)).astype(jnp.float32)  # [N_DERIVED, nmul, Ngrid]


# ----------------------------------------------------------------------------
# One SAC-SMA timestep (pure function of state + precomputed params).
# Shapes: P_t/Ep_t: (1, G), states/params: (nmul, G).
# ----------------------------------------------------------------------------
def _sacsma_step(P_t, Ep_t, UZTW, UZFW, LZTW, LZFWP, LZFWS, prm):
    (pctim, uztwm, uzfwm, kuz, pbase, zperc, pw,
     lztwm, lzfwpm, lzfwsm, pfree, klzp, klzs,
     inv_uztwm, inv_uzfwm, inv_uz_sum, inv_uztwm_eps,
     inv_lztwm, inv_lzfwpm, inv_lzfwsm,
     lz_ps, inv_lz_ps, inv_rl_den, inv_lz_cap_eps, inv_ut_lt) = prm
    zero = jnp.zeros_like(UZTW)

    flux_qdir = pctim * P_t
    flux_peff = (1.0 - pctim) * P_t
    UZTW = UZTW + flux_peff
    flux_Ru = jnp.where(UZTW * inv_uztwm < UZFW * inv_uzfwm,
                        (uztwm * UZFW - uzfwm * UZTW) * inv_uz_sum, zero)
    flux_Ru = jnp.minimum(flux_Ru, UZFW)
    UZFW = jnp.maximum(UZFW - flux_Ru, 1e-4)
    UZTW = UZTW + flux_Ru
    flux_Twexu = jnp.maximum(UZTW - uztwm, 0.0)
    UZTW = jnp.maximum(UZTW - flux_Twexu, 1e-4)
    flux_Euztw = Ep_t * UZTW * inv_uztwm_eps
    flux_Euztw = jnp.minimum(flux_Euztw, UZTW)
    UZTW = jnp.maximum(UZTW - flux_Euztw, 1e-4)
    UZFW = UZFW + flux_Twexu
    flux_Qsur = jnp.maximum(UZFW - uzfwm, 0.0)
    UZFW = jnp.maximum(UZFW - flux_Qsur, 1e-4)
    flux_Qint = kuz * UZFW
    UZFW = jnp.maximum(UZFW - flux_Qint, 1e-4)

    LZ_def = jnp.maximum(lztwm - LZTW + (lzfwpm - LZFWP) + (lzfwsm - LZFWS), 0.0)
    ratio = LZ_def * inv_lz_cap_eps
    # x ** p (x >= 0, p >= 1): exact via exp/log (EUP), 0 for x == 0 (matches torch pow).
    ratio_pow = jnp.where(ratio > 0.0,
                          jnp.exp(pw * jnp.log(jnp.maximum(ratio, 1e-30))), zero)
    Pc_demand = pbase * (1.0 + zperc * ratio_pow)
    flux_Pc = Pc_demand * UZFW * inv_uzfwm
    flux_Pc = jnp.minimum(flux_Pc, UZFW)
    UZFW = jnp.maximum(UZFW - flux_Pc, 1e-4)
    flux_Euzfw = jnp.maximum(Ep_t - flux_Euztw, 0.0)
    flux_Euzfw = jnp.minimum(flux_Euzfw, UZFW)
    UZFW = jnp.maximum(UZFW - flux_Euzfw, 1e-4)

    Rl_nom = -LZTW * lz_ps + lztwm * (LZFWP + LZFWS)
    Rl_val = Rl_nom * inv_rl_den
    flux_Rlp = jnp.where(LZTW * inv_lztwm < (LZFWP + LZFWS) * inv_lz_ps,
                         lzfwpm * Rl_val, zero)
    flux_Rlp = jnp.minimum(flux_Rlp, LZFWP)
    LZFWP = jnp.maximum(LZFWP - flux_Rlp, 1e-4)
    LZTW = LZTW + flux_Rlp
    # NOTE: condition uses updated LZTW/LZFWP but the pre-update Rl_val, exactly as torch.
    flux_Rls = jnp.where(LZTW * inv_lztwm < (LZFWP + LZFWS) * inv_lz_ps,
                         lzfwsm * Rl_val, zero)
    flux_Rls = jnp.minimum(flux_Rls, LZFWS)
    LZFWS = jnp.maximum(LZFWS - flux_Rls, 1e-4)
    LZTW = LZTW + flux_Rls

    flux_Pctw = (1.0 - pfree) * flux_Pc
    flux_Pcfw = pfree * flux_Pc
    LZTW = LZTW + flux_Pctw
    flux_twexl = jnp.maximum(LZTW - lztwm, 0.0)
    LZTW = jnp.maximum(LZTW - flux_twexl, 1e-4)
    flux_Elztw = jnp.where((LZTW > 0.0) & (Ep_t > flux_Euztw + flux_Euzfw),
                           (Ep_t - flux_Euztw - flux_Euzfw) * LZTW * inv_ut_lt, zero)
    flux_Elztw = jnp.minimum(flux_Elztw, LZTW)
    LZTW = jnp.maximum(LZTW - flux_Elztw, 1e-4)

    defP = (lzfwpm - LZFWP) * inv_lzfwpm
    defS = (lzfwsm - LZFWS) * inv_lzfwsm
    invD1 = pl.reciprocal(defP + defS + 1e-4, approx=True)
    flux_Pcfwp = defP * invD1 * flux_Pcfw
    flux_twexlp = defP * invD1 * flux_twexl
    LZFWP = LZFWP + flux_Pcfwp + flux_twexlp
    flux_Qbfp = klzp * LZFWP
    LZFWP = jnp.maximum(LZFWP - flux_Qbfp, 1e-4)
    extra_LZFWP = jnp.maximum(LZFWP - lzfwpm, 0.0)
    LZFWP = jnp.maximum(LZFWP - extra_LZFWP, 1e-4)
    LZFWP = jnp.where(LZFWP >= lzfwpm, lzfwpm - 1e-4, LZFWP)
    flux_Qbfp = flux_Qbfp + extra_LZFWP

    flux_Pcfws = jnp.maximum(flux_Pcfw - flux_Pcfwp, 0.0)
    defP2 = (lzfwpm - LZFWP) * inv_lzfwpm   # uses updated LZFWP (as in torch)
    invD2 = pl.reciprocal(defP2 + defS + 1e-4, approx=True)
    flux_twexls = defS * invD2 * flux_twexl
    LZFWS = LZFWS + flux_Pcfws + flux_twexls
    flux_Qbfs = klzs * LZFWS
    LZFWS = jnp.maximum(LZFWS - flux_Qbfs, 1e-4)
    extra_LZFWS = jnp.maximum(LZFWS - lzfwsm, 0.0)
    LZFWS = jnp.maximum(LZFWS - extra_LZFWS, 1e-4)
    LZFWS = jnp.where(LZFWS >= lzfwsm, lzfwsm - 1e-4, LZFWS)
    flux_Qbfs = flux_Qbfs + extra_LZFWS

    srflow = flux_qdir + flux_Qsur
    ssflow = flux_Qint
    gwflow = flux_Qbfp + flux_Qbfs
    aet = flux_Euztw + flux_Euzfw + flux_Elztw
    return UZTW, UZFW, LZTW, LZFWP, LZFWS, srflow, ssflow, gwflow, aet


# ----------------------------------------------------------------------------
# Pallas kernel 1: chunked sequential SAC-SMA water-balance time loop.
# ----------------------------------------------------------------------------
def _sacsma_chunk_kernel(pm_ref, pet_ref, prm_ref,
                         sr_ref, ss_ref, gw_ref, aet_ref,
                         uztw_ref, uzfw_ref, lztw_ref, lzfwp_ref, lzfws_ref):
    @pl.when(pl.program_id(1) == 0)
    def _init():
        init = jnp.full(uztw_ref.shape, 1e-4, dtype=jnp.float32)
        uztw_ref[...] = init
        uzfw_ref[...] = init
        lztw_ref[...] = init
        lzfwp_ref[...] = init
        lzfws_ref[...] = init

    prm = tuple(prm_ref[i] for i in range(N_DERIVED))   # each (nmul, G_BLK)
    t_blk = pm_ref.shape[0]
    inv_nmul = 1.0 / float(uztw_ref.shape[0])

    @pl.loop(0, t_blk)
    def _step(ti):
        P_t = pm_ref[pl.ds(ti, 1), :]     # (1, G_BLK), broadcast over nmul in-kernel
        Ep_t = pet_ref[pl.ds(ti, 1), :]
        UZTW, UZFW, LZTW, LZFWP, LZFWS, srf, ssf, gwf, aet = _sacsma_step(
            P_t, Ep_t,
            uztw_ref[...], uzfw_ref[...], lztw_ref[...],
            lzfwp_ref[...], lzfws_ref[...], prm)
        uztw_ref[...] = UZTW
        uzfw_ref[...] = UZFW
        lztw_ref[...] = LZTW
        lzfwp_ref[...] = LZFWP
        lzfws_ref[...] = LZFWS
        # nmul-mean in-kernel; lane-dense (1, G_BLK) stores.
        sr_ref[pl.ds(ti, 1), :] = jnp.sum(srf, axis=0, keepdims=True) * inv_nmul
        ss_ref[pl.ds(ti, 1), :] = jnp.sum(ssf, axis=0, keepdims=True) * inv_nmul
        gw_ref[pl.ds(ti, 1), :] = jnp.sum(gwf, axis=0, keepdims=True) * inv_nmul
        aet_ref[pl.ds(ti, 1), :] = jnp.sum(aet, axis=0, keepdims=True) * inv_nmul


def _run_sacsma_timeloop(P, PET, derived_params):
    """P, PET: [Nstep, Ngrid]; derived_params: [N_DERIVED, nmul, Ngrid].
    Returns nmul-averaged (srflow, ssflow, gwflow, aet), each [Nstep, Ngrid]."""
    Nstep, Ngrid = P.shape
    nmul = derived_params.shape[1]

    G_BLK = min(512, _round_up(Ngrid, 128))
    Gp = _round_up(Ngrid, G_BLK)
    T_BLK = min(128, _round_up(Nstep, 8))
    Tp = _round_up(Nstep, T_BLK)

    P_pad = jnp.pad(P.astype(jnp.float32), ((0, Tp - Nstep), (0, Gp - Ngrid)))
    PET_pad = jnp.pad(PET.astype(jnp.float32), ((0, Tp - Nstep), (0, Gp - Ngrid)))
    # Edge-pad params so padded basins stay numerically well-conditioned (no NaN/Inf).
    prm_pad = jnp.pad(derived_params, ((0, 0), (0, 0), (0, Gp - Ngrid)), mode="edge")

    n_g = Gp // G_BLK
    n_t = Tp // T_BLK

    def step_spec():
        return pl.BlockSpec((T_BLK, G_BLK), lambda g, t: (t, g))

    prm_spec = pl.BlockSpec((N_DERIVED, nmul, G_BLK), lambda g, t: (0, 0, g))
    out_shape = tuple(jax.ShapeDtypeStruct((Tp, Gp), jnp.float32) for _ in range(4))

    grid_spec = pltpu.PrefetchScalarGridSpec(
        num_scalar_prefetch=0,
        grid=(n_g, n_t),
        in_specs=[step_spec(), step_spec(), prm_spec],
        out_specs=[step_spec() for _ in range(4)],
        scratch_shapes=[pltpu.VMEM((nmul, G_BLK), jnp.float32) for _ in range(5)],
    )
    outs = pl.pallas_call(
        _sacsma_chunk_kernel,
        grid_spec=grid_spec,
        out_shape=out_shape,
        compiler_params=pltpu.CompilerParams(
            dimension_semantics=("parallel", "arbitrary")),
    )(P_pad, PET_pad, prm_pad)
    return tuple(o[:Nstep, :Ngrid] for o in outs)


# ----------------------------------------------------------------------------
# Pallas kernel 2: gamma unit-hydrograph grouped causal conv1d (UH_conv).
# ----------------------------------------------------------------------------
def _uh_conv_kernel(rf_ref, uh_ref, y_ref):
    L = uh_ref.shape[-1]
    rf = rf_ref[...]                       # (R_BLK, Tp), trailing >= L-1 zeros
    acc = uh_ref[:, 0:1] * rf
    for k in range(1, L):                  # static tap loop (L = lenF <= 15)
        # Circular roll == causal shift because the last L-1 lanes of rf are zero.
        acc = acc + uh_ref[:, k:k + 1] * pltpu.roll(rf, shift=k, axis=1)
    y_ref[...] = acc


def uh_conv(rf, uh):
    """Causal grouped conv: y[n, t] = sum_k uh[n, k] * rf[n, t-k].  rf:[N,T], uh:[N,L]."""
    N, T = rf.shape
    L = uh.shape[1]
    R_BLK = min(64, _round_up(N, 8))
    Np = _round_up(N, R_BLK)
    Tp = _round_up(T + L - 1, 128)         # lane-dense, with >= L-1 trailing zeros
    rf_pad = jnp.pad(rf.astype(jnp.float32), ((0, Np - N), (0, Tp - T)))
    uh_pad = jnp.pad(uh.astype(jnp.float32), ((0, Np - N), (0, 0)))

    y = pl.pallas_call(
        _uh_conv_kernel,
        grid_spec=pltpu.PrefetchScalarGridSpec(
            num_scalar_prefetch=0,
            grid=(Np // R_BLK,),
            in_specs=[pl.BlockSpec((R_BLK, Tp), lambda r: (r, 0)),
                      pl.BlockSpec((R_BLK, L), lambda r: (r, 0))],
            out_specs=pl.BlockSpec((R_BLK, Tp), lambda r: (r, 0)),
        ),
        out_shape=jax.ShapeDtypeStruct((Np, Tp), jnp.float32),
        compiler_params=pltpu.CompilerParams(dimension_semantics=("parallel",)),
    )(rf_pad, uh_pad)
    return y[:N, :T]


# ----------------------------------------------------------------------------
# Plain-JAX glue: UH_gamma weights, parameter scaling, output assembly.
# ----------------------------------------------------------------------------
def uh_gamma(a, b, lenF):
    """a, b: [Ngrid] (constant over time) -> gamma UH weights [lenF, Ngrid]."""
    aa = jnp.maximum(a, 0.0) + 0.1      # relu + 0.1
    theta = jnp.maximum(b, 0.0) + 0.5   # relu + 0.5
    t = jnp.arange(0.5, lenF * 1.0, 1.0, dtype=jnp.float32)[:, None]  # [lenF, 1]
    denom = jnp.exp(jax.lax.lgamma(aa)) * theta ** aa
    w = (1.0 / denom) * t ** (aa - 1.0) * jnp.exp(-t / theta)
    return w / jnp.sum(w, axis=0, keepdims=True)


@functools.partial(jax.jit, static_argnames=("nmul", "routing"))
def sacsma_forward(x_hydro_model, c_hydro_model, params_raw, conv_params_hydro,
                   nmul=4, routing=True):
    """
    x_hydro_model:     [Nstep, Ngrid, 4]   forcings: (prcp, tmax, tmin, pet_dataset)
    c_hydro_model:     [Ngrid, n_attr]     static attributes (unused: pet_module='dataset')
    params_raw:        [Nstep, Ngrid, 11, nmul]  raw params in [0, 1]
    conv_params_hydro: [Ngrid, 2]          raw routing params in [0, 1]
    """
    del c_hydro_model, nmul  # attrs only needed for Hargreaves PET; nmul from shapes
    Nstep, Ngrid, _ = x_hydro_model.shape

    P = x_hydro_model[:, :, 0].astype(jnp.float32)
    PET_series = x_hydro_model[:, :, 3].astype(jnp.float32)

    # Static parameters = last-timestep value; all derived params hoisted here.
    derived = _derive_params(params_raw[-1].astype(jnp.float32))  # [25, nmul, Ngrid]

    sr, ss, gw, aet = _run_sacsma_timeloop(P, PET_series, derived)  # each [Nstep, Ngrid]
    q = sr + ss + gw  # Q = qdir+Qsur+Qint+Qbfp+Qbfs == sr+ss+gw exactly

    Q_mean = q[:, :, None]
    sr_mean = sr[:, :, None]
    ss_mean = ss[:, :, None]
    gw_mean = gw[:, :, None]

    if routing:
        lo_a, hi_a = CONV_ROUTING_BOUNDS[0]
        lo_b, hi_b = CONV_ROUTING_BOUNDS[1]
        tempa = conv_params_hydro[:, 0] * (hi_a - lo_a) + lo_a
        tempb = conv_params_hydro[:, 1] * (hi_b - lo_b) + lo_b
        lenF = min(Nstep, 15)
        UH = uh_gamma(tempa, tempb, lenF)          # [lenF, Ngrid]
        uh_g = jnp.transpose(UH)                   # [Ngrid, lenF]

        # Route the 3 components in one batched conv; flow_sim follows by linearity.
        rf_all = jnp.concatenate([sr.T, ss.T, gw.T], axis=0)   # [3*Ngrid, Nstep]
        uh_all = jnp.tile(uh_g, (3, 1))
        y_all = uh_conv(rf_all, uh_all).reshape(3, Ngrid, Nstep)
        srflow_rout = jnp.transpose(y_all[0])[:, :, None]
        ssflow_rout = jnp.transpose(y_all[1])[:, :, None]
        gwflow_rout = jnp.transpose(y_all[2])[:, :, None]
        Qsrout = srflow_rout + ssflow_rout + gwflow_rout
    else:
        Qsrout, srflow_rout, ssflow_rout, gwflow_rout = Q_mean, sr_mean, ss_mean, gw_mean

    return dict(
        flow_sim=Qsrout,
        srflow=srflow_rout,
        ssflow=ssflow_rout,
        gwflow=gwflow_rout,
        PET_hydro=PET_series[:, :, None],   # PET repeated over nmul -> mean == PET
        AET_hydro=aet[:, :, None],
        flow_sim_no_rout=Q_mean,
        srflow_no_rout=sr_mean,
        ssflow_no_rout=ss_mean,
        gwflow_no_rout=gw_mean,
    )


# TODO(synk): warm-up recursive self-call, Hargreaves/Hamon PET modules, and the
# torch.bernoulli dynamic-parameter dropout path (dy_params) are not translated
# (static params taken from the last timestep / 'dataset' PET config assumed).

if __name__ == "__main__":
    key = jax.random.PRNGKey(0)
    Nstep, Ngrid, nmul = 24, 8, 4
    k1, k2, k3, k4, k5, k6 = jax.random.split(key, 6)

    prcp = jax.random.uniform(k1, (Nstep, Ngrid), jnp.float32) * 10.0
    tmax = jax.random.uniform(k2, (Nstep, Ngrid), jnp.float32) * 10.0 + 10.0
    tmin = tmax - 10.0
    pet = jax.random.uniform(k3, (Nstep, Ngrid), jnp.float32) * 5.0
    x_hydro_model = jnp.stack([prcp, tmax, tmin, pet], axis=-1)      # [24, 8, 4]
    c_hydro_model = jax.random.uniform(k4, (Ngrid, 2), jnp.float32)  # [8, 2]
    params_raw = jax.random.uniform(k5, (Nstep, Ngrid, len(PARAM_BOUNDS), nmul),
                                    jnp.float32)                     # [24, 8, 11, 4]
    conv_params_hydro = jax.random.uniform(k6, (Ngrid, 2), jnp.float32)

    out = sacsma_forward(x_hydro_model, c_hydro_model, params_raw,
                         conv_params_hydro, nmul=nmul, routing=True)
    jax.block_until_ready(out)
    assert out["flow_sim"].shape == (Nstep, Ngrid, 1)
    for name, val in out.items():
        assert bool(jnp.all(jnp.isfinite(val))), name
    print("KERNEL_OK")
</pallas_src>

<mosaic_0001>
module attributes {stable_mosaic.version = 11 : i64} {
  func.func @_sacsma_chunk_kernel(%arg0: i32, %arg1: i32, %arg2: memref<24x128xf32, #tpu.memory_space<vmem>>, %arg3: memref<24x128xf32, #tpu.memory_space<vmem>>, %arg4: memref<25x4x128xf32, #tpu.memory_space<vmem>>, %arg5: memref<24x128xf32, #tpu.memory_space<vmem>>, %arg6: memref<24x128xf32, #tpu.memory_space<vmem>>, %arg7: memref<24x128xf32, #tpu.memory_space<vmem>>, %arg8: memref<24x128xf32, #tpu.memory_space<vmem>>, %arg9: memref<4x128xf32, #tpu.memory_space<vmem>>, %arg10: memref<4x128xf32, #tpu.memory_space<vmem>>, %arg11: memref<4x128xf32, #tpu.memory_space<vmem>>, %arg12: memref<4x128xf32, #tpu.memory_space<vmem>>, %arg13: memref<4x128xf32, #tpu.memory_space<vmem>>) attributes {dimension_semantics = [#tpu.dimension_semantics<parallel>, #tpu.dimension_semantics<arbitrary>], iteration_bounds = array<i64: 1, 1>, scalar_prefetch = 0 : i64, scratch_operands = 5 : i64, tpu.core_type = #tpu.core_type<tc>, window_params = [{transform_indices = @transform_0, window_bounds = array<i64: 24, 128>}, {transform_indices = @transform_1, window_bounds = array<i64: 24, 128>}, {transform_indices = @transform_2, window_bounds = array<i64: 25, 4, 128>}, {transform_indices = @transform_3, window_bounds = array<i64: 24, 128>}, {transform_indices = @transform_4, window_bounds = array<i64: 24, 128>}, {transform_indices = @transform_5, window_bounds = array<i64: 24, 128>}, {transform_indices = @transform_6, window_bounds = array<i64: 24, 128>}]} {
    %c0_i32 = arith.constant 0 : i32
    %0 = arith.cmpi eq, %arg1, %c0_i32 : i32
    %1 = arith.extui %0 : i1 to i32
    %c0_i32_0 = arith.constant 0 : i32
    %2 = arith.cmpi ne, %1, %c0_i32_0 : i32
    scf.if %2 {
      %cst = arith.constant 9.99999974E-5 : f32
      %54 = vector.broadcast %cst : f32 to vector<4x128xf32>
      %c0_53 = arith.constant 0 : index
      %c0_54 = arith.constant 0 : index
      %55 = vector.load %arg9[%c0_53, %c0_54] : memref<4x128xf32, #tpu.memory_space<vmem>>, vector<4x128xf32>
      tpu.vector_store %arg9[%c0_53, %c0_54], %54 {strides = array<i32>} : memref<4x128xf32, #tpu.memory_space<vmem>>, vector<4x128xf32>,
      %c0_55 = arith.constant 0 : index
      %c0_56 = arith.constant 0 : index
      %56 = vector.load %arg10[%c0_55, %c0_56] : memref<4x128xf32, #tpu.memory_space<vmem>>, vector<4x128xf32>
      tpu.vector_store %arg10[%c0_55, %c0_56], %54 {strides = array<i32>} : memref<4x128xf32, #tpu.memory_space<vmem>>, vector<4x128xf32>,
      %c0_57 = arith.constant 0 : index
      %c0_58 = arith.constant 0 : index
      %57 = vector.load %arg11[%c0_57, %c0_58] : memref<4x128xf32, #tpu.memory_space<vmem>>, vector<4x128xf32>
      tpu.vector_store %arg11[%c0_57, %c0_58], %54 {strides = array<i32>} : memref<4x128xf32, #tpu.memory_space<vmem>>, vector<4x128xf32>,
      %c0_59 = arith.constant 0 : index
      %c0_60 = arith.constant 0 : index
      %58 = vector.load %arg12[%c0_59, %c0_60] : memref<4x128xf32, #tpu.memory_space<vmem>>, vector<4x128xf32>
      tpu.vector_store %arg12[%c0_59, %c0_60], %54 {strides = array<i32>} : memref<4x128xf32, #tpu.memory_space<vmem>>, vector<4x128xf32>,
      %c0_61 = arith.constant 0 : index
      %c0_62 = arith.constant 0 : index
      %59 = vector.load %arg13[%c0_61, %c0_62] : memref<4x128xf32, #tpu.memory_space<vmem>>, vector<4x128xf32>
      tpu.vector_store %arg13[%c0_61, %c0_62], %54 {strides = array<i32>} : memref<4x128xf32, #tpu.memory_space<vmem>>, vector<4x128xf32>,
    } else {
    }
    %c0 = arith.constant 0 : index
    %c0_1 = arith.constant 0 : index
    %c0_2 = arith.constant 0 : index
    %3 = vector.load %arg4[%c0, %c0_1, %c0_2] : memref<25x4x128xf32, #tpu.memory_space<vmem>>, vector<1x4x128xf32>
    %4 = vector.shape_cast %3 : vector<1x4x128xf32> to vector<4x128xf32>
    %c1 = arith.constant 1 : index
    %c0_3 = arith.constant 0 : index
    %c0_4 = arith.constant 0 : index
    %5 = vector.load %arg4[%c1, %c0_3, %c0_4] : memref<25x4x128xf32, #tpu.memory_space<vmem>>, vector<1x4x128xf32>
    %6 = vector.shape_cast %5 : vector<1x4x128xf32> to vector<4x128xf32>
    %c2 = arith.constant 2 : index
    %c0_5 = arith.constant 0 : index
    %c0_6 = arith.constant 0 : index
    %7 = vector.load %arg4[%c2, %c0_5, %c0_6] : memref<25x4x128xf32, #tpu.memory_space<vmem>>, vector<1x4x128xf32>
    %8 = vector.shape_cast %7 : vector<1x4x128xf32> to vector<4x128xf32>
    %c3 = arith.constant 3 : index
    %c0_7 = arith.constant 0 : index
    %c0_8 = arith.constant 0 : index
    %9 = vector.load %arg4[%c3, %c0_7, %c0_8] : memref<25x4x128xf32, #tpu.memory_space<vmem>>, vector<1x4x128xf32>
    %10 = vector.shape_cast %9 : vector<1x4x128xf32> to vector<4x128xf32>
    %c4 = arith.constant 4 : index
    %c0_9 = arith.constant 0 : index
    %c0_10 = arith.constant 0 : index
    %11 = vector.load %arg4[%c4, %c0_9, %c0_10] : memref<25x4x128xf32, #tpu.memory_space<vmem>>, vector<1x4x128xf32>
    %12 = vector.shape_cast %11 : vector<1x4x128xf32> to vector<4x128xf32>
    %c5 = arith.constant 5 : index
    %c0_11 = arith.constant 0 : index
    %c0_12 = arith.constant 0 : index
    %13 = vector.load %arg4[%c5, %c0_11, %c0_12] : memref<25x4x128xf32, #tpu.memory_space<vmem>>, vector<1x4x128xf32>
    %14 = vector.shape_cast %13 : vector<1x4x128xf32> to vector<4x128xf32>
    %c6 = arith.constant 6 : index
    %c0_13 = arith.constant 0 : index
    %c0_14 = arith.constant 0 : index
    %15 = vector.load %arg4[%c6, %c0_13, %c0_14] : memref<25x4x128xf32, #tpu.memory_space<vmem>>, vector<1x4x128xf32>
    %16 = vector.shape_cast %15 : vector<1x4x128xf32> to vector<4x128xf32>
    %c7 = arith.constant 7 : index
    %c0_15 = arith.constant 0 : index
    %c0_16 = arith.constant 0 : index
    %17 = vector.load %arg4[%c7, %c0_15, %c0_16] : memref<25x4x128xf32, #tpu.memory_space<vmem>>, vector<1x4x128xf32>
    %18 = vector.shape_cast %17 : vector<1x4x128xf32> to vector<4x128xf32>
    %c8 = arith.constant 8 : index
    %c0_17 = arith.constant 0 : index
    %c0_18 = arith.constant 0 : index
    %19 = vector.load %arg4[%c8, %c0_17, %c0_18] : memref<25x4x128xf32, #tpu.memory_space<vmem>>, vector<1x4x128xf32>
    %20 = vector.shape_cast %19 : vector<1x4x128xf32> to vector<4x128xf32>
    %c9 = arith.constant 9 : index
    %c0_19 = arith.constant 0 : index
    %c0_20 = arith.constant 0 : index
    %21 = vector.load %arg4[%c9, %c0_19, %c0_20] : memref<25x4x128xf32, #tpu.memory_space<vmem>>, vector<1x4x128xf32>
    %22 = vector.shape_cast %21 : vector<1x4x128xf32> to vector<4x128xf32>
    %c10 = arith.constant 10 : index
    %c0_21 = arith.constant 0 : index
    %c0_22 = arith.constant 0 : index
    %23 = vector.load %arg4[%c10, %c0_21, %c0_22] : memref<25x4x128xf32, #tpu.memory_space<vmem>>, vector<1x4x128xf32>
    %24 = vector.shape_cast %23 : vector<1x4x128xf32> to vector<4x128xf32>
    %c11 = arith.constant 11 : index
    %c0_23 = arith.constant 0 : index
    %c0_24 = arith.constant 0 : index
    %25 = vector.load %arg4[%c11, %c0_23, %c0_24] : memref<25x4x128xf32, #tpu.memory_space<vmem>>, vector<1x4x128xf32>
    %26 = vector.shape_cast %25 : vector<1x4x128xf32> to vector<4x128xf32>
    %c12 = arith.constant 12 : index
    %c0_25 = arith.constant 0 : index
    %c0_26 = arith.constant 0 : index
    %27 = vector.load %arg4[%c12, %c0_25, %c0_26] : memref<25x4x128xf32, #tpu.memory_space<vmem>>, vector<1x4x128xf32>
    %28 = vector.shape_cast %27 : vector<1x4x128xf32> to vector<4x128xf32>
    %c13 = arith.constant 13 : index
    %c0_27 = arith.constant 0 : index
    %c0_28 = arith.constant 0 : index
    %29 = vector.load %arg4[%c13, %c0_27, %c0_28] : memref<25x4x128xf32, #tpu.memory_space<vmem>>, vector<1x4x128xf32>
    %30 = vector.shape_cast %29 : vector<1x4x128xf32> to vector<4x128xf32>
    %c14 = arith.constant 14 : index
    %c0_29 = arith.constant 0 : index
    %c0_30 = arith.constant 0 : index
    %31 = vector.load %arg4[%c14, %c0_29, %c0_30] : memref<25x4x128xf32, #tpu.memory_space<vmem>>, vector<1x4x128xf32>
    %32 = vector.shape_cast %31 : vector<1x4x128xf32> to vector<4x128xf32>
    %c15 = arith.constant 15 : index
    %c0_31 = arith.constant 0 : index
    %c0_32 = arith.constant 0 : index
    %33 = vector.load %arg4[%c15, %c0_31, %c0_32] : memref<25x4x128xf32, #tpu.memory_space<vmem>>, vector<1x4x128xf32>
    %34 = vector.shape_cast %33 : vector<1x4x128xf32> to vector<4x128xf32>
    %c16 = arith.constant 16 : index
    %c0_33 = arith.constant 0 : index
    %c0_34 = arith.constant 0 : index
    %35 = vector.load %arg4[%c16, %c0_33, %c0_34] : memref<25x4x128xf32, #tpu.memory_space<vmem>>, vector<1x4x128xf32>
    %36 = vector.shape_cast %35 : vector<1x4x128xf32> to vector<4x128xf32>
    %c17 = arith.constant 17 : index
    %c0_35 = arith.constant 0 : index
    %c0_36 = arith.constant 0 : index
    %37 = vector.load %arg4[%c17, %c0_35, %c0_36] : memref<25x4x128xf32, #tpu.memory_space<vmem>>, vector<1x4x128xf32>
    %38 = vector.shape_cast %37 : vector<1x4x128xf32> to vector<4x128xf32>
    %c18 = arith.constant 18 : index
    %c0_37 = arith.constant 0 : index
    %c0_38 = arith.constant 0 : index
    %39 = vector.load %arg4[%c18, %c0_37, %c0_38] : memref<25x4x128xf32, #tpu.memory_space<vmem>>, vector<1x4x128xf32>
    %40 = vector.shape_cast %39 : vector<1x4x128xf32> to vector<4x128xf32>
    %c19 = arith.constant 19 : index
    %c0_39 = arith.constant 0 : index
    %c0_40 = arith.constant 0 : index
    %41 = vector.load %arg4[%c19, %c0_39, %c0_40] : memref<25x4x128xf32, #tpu.memory_space<vmem>>, vector<1x4x128xf32>
    %42 = vector.shape_cast %41 : vector<1x4x128xf32> to vector<4x128xf32>
    %c20 = arith.constant 20 : index
    %c0_41 = arith.constant 0 : index
    %c0_42 = arith.constant 0 : index
    %43 = vector.load %arg4[%c20, %c0_41, %c0_42] : memref<25x4x128xf32, #tpu.memory_space<vmem>>, vector<1x4x128xf32>
    %44 = vector.shape_cast %43 : vector<1x4x128xf32> to vector<4x128xf32>
    %c21 = arith.constant 21 : index
    %c0_43 = arith.constant 0 : index
    %c0_44 = arith.constant 0 : index
    %45 = vector.load %arg4[%c21, %c0_43, %c0_44] : memref<25x4x128xf32, #tpu.memory_space<vmem>>, vector<1x4x128xf32>
    %46 = vector.shape_cast %45 : vector<1x4x128xf32> to vector<4x128xf32>
    %c22 = arith.constant 22 : index
    %c0_45 = arith.constant 0 : index
    %c0_46 = arith.constant 0 : index
    %47 = vector.load %arg4[%c22, %c0_45, %c0_46] : memref<25x4x128xf32, #tpu.memory_space<vmem>>, vector<1x4x128xf32>
    %48 = vector.shape_cast %47 : vector<1x4x128xf32> to vector<4x128xf32>
    %c23 = arith.constant 23 : index
    %c0_47 = arith.constant 0 : index
    %c0_48 = arith.constant 0 : index
    %49 = vector.load %arg4[%c23, %c0_47, %c0_48] : memref<25x4x128xf32, #tpu.memory_space<vmem>>, vector<1x4x128xf32>
    %50 = vector.shape_cast %49 : vector<1x4x128xf32> to vector<4x128xf32>
    %c24 = arith.constant 24 : index
    %c0_49 = arith.constant 0 : index
    %c0_50 = arith.constant 0 : index
    %51 = vector.load %arg4[%c24, %c0_49, %c0_50] : memref<25x4x128xf32, #tpu.memory_space<vmem>>, vector<1x4x128xf32>
    %52 = vector.shape_cast %51 : vector<1x4x128xf32> to vector<4x128xf32>
    %c0_i32_51 = arith.constant 0 : i32
    %c24_i32 = arith.constant 24 : i32
    %53 = arith.addi %c0_i32_51, %c24_i32 : i32
    %c1_i32 = arith.constant 1 : i32
    scf.for %arg14 = %c0_i32_51 to %53 step %c1_i32  : i32 {
      %c1_i32_53 = arith.constant 1 : i32
      %54 = arith.muli %arg14, %c1_i32_53 : i32
      %c0_i32_54 = arith.constant 0 : i32
      %55 = arith.addi %c0_i32_54, %54 : i32
      %56 = arith.index_cast %55 : i32 to index
      %c0_55 = arith.constant 0 : index
      %57 = vector.load %arg2[%56, %c0_55] : memref<24x128xf32, #tpu.memory_space<vmem>>, vector<1x128xf32>
      %58 = arith.index_cast %55 : i32 to index
      %c0_56 = arith.constant 0 : index
      %59 = vector.load %arg3[%58, %c0_56] : memref<24x128xf32, #tpu.memory_space<vmem>>, vector<1x128xf32>
      %c0_57 = arith.constant 0 : index
      %c0_58 = arith.constant 0 : index
      %60 = vector.load %arg9[%c0_57, %c0_58] : memref<4x128xf32, #tpu.memory_space<vmem>>, vector<4x128xf32>
      %c0_59 = arith.constant 0 : index
      %c0_60 = arith.constant 0 : index
      %61 = vector.load %arg10[%c0_59, %c0_60] : memref<4x128xf32, #tpu.memory_space<vmem>>, vector<4x128xf32>
      %c0_61 = arith.constant 0 : index
      %c0_62 = arith.constant 0 : index
      %62 = vector.load %arg11[%c0_61, %c0_62] : memref<4x128xf32, #tpu.memory_space<vmem>>, vector<4x128xf32>
      %c0_63 = arith.constant 0 : index
      %c0_64 = arith.constant 0 : index
      %63 = vector.load %arg12[%c0_63, %c0_64] : memref<4x128xf32, #tpu.memory_space<vmem>>, vector<4x128xf32>
      %c0_65 = arith.constant 0 : index
      %c0_66 = arith.constant 0 : index
      %64 = vector.load %arg13[%c0_65, %c0_66] : memref<4x128xf32, #tpu.memory_space<vmem>>, vector<4x128xf32>
      %cst = arith.constant 0.000000e+00 : f32
      %65 = vector.broadcast %cst : f32 to vector<4x128xf32>
      %66 = vector.broadcast %57 : vector<1x128xf32> to vector<4x128xf32>
      %67 = arith.mulf %4, %66 : vector<4x128xf32>
      %cst_67 = arith.constant 1.000000e+00 : f32
      %68 = vector.broadcast %cst_67 : f32 to vector<4x128xf32>
      %69 = arith.subf %68, %4 : vector<4x128xf32>
      %70 = vector.broadcast %57 : vector<1x128xf32> to vector<4x128xf32>
      %71 = arith.mulf %69, %70 : vector<4x128xf32>
      %72 = arith.addf %60, %71 : vector<4x128xf32>
      %73 = arith.mulf %72, %30 : vector<4x128xf32>
      %74 = arith.mulf %61, %32 : vector<4x128xf32>
      %75 = arith.cmpf olt, %73, %74 : vector<4x128xf32>
      %76 = arith.mulf %6, %61 : vector<4x128xf32>
      %77 = arith.mulf %8, %72 : vector<4x128xf32>
      %78 = arith.subf %76, %77 : vector<4x128xf32>
      %79 = arith.mulf %78, %34 : vector<4x128xf32>
      %80 = arith.select %75, %79, %65 : vector<4x128xi1>, vector<4x128xf32>
      %81 = arith.minimumf %80, %61 : vector<4x128xf32>
      %82 = arith.subf %61, %81 : vector<4x128xf32>
      %cst_68 = arith.constant 9.99999974E-5 : f32
      %83 = vector.broadcast %cst_68 : f32 to vector<4x128xf32>
      %84 = arith.maximumf %82, %83 : vector<4x128xf32>
      %85 = arith.addf %72, %81 : vector<4x128xf32>
      %86 = arith.subf %85, %6 : vector<4x128xf32>
      %cst_69 = arith.constant 0.000000e+00 : f32
      %87 = vector.broadcast %cst_69 : f32 to vector<4x128xf32>
      %88 = arith.maximumf %86, %87 : vector<4x128xf32>
      %89 = arith.subf %85, %88 : vector<4x128xf32>
      %cst_70 = arith.constant 9.99999974E-5 : f32
      %90 = vector.broadcast %cst_70 : f32 to vector<4x128xf32>
      %91 = arith.maximumf %89, %90 : vector<4x128xf32>
      %92 = vector.broadcast %59 : vector<1x128xf32> to vector<4x128xf32>
      %93 = arith.mulf %92, %91 : vector<4x128xf32>
      %94 = arith.mulf %93, %36 : vector<4x128xf32>
      %95 = arith.minimumf %94, %91 : vector<4x128xf32>
      %96 = arith.subf %91, %95 : vector<4x128xf32>
      %cst_71 = arith.constant 9.99999974E-5 : f32
      %97 = vector.broadcast %cst_71 : f32 to vector<4x128xf32>
      %98 = arith.maximumf %96, %97 : vector<4x128xf32>
      %99 = arith.addf %84, %88 : vector<4x128xf32>
      %100 = arith.subf %99, %8 : vector<4x128xf32>
      %cst_72 = arith.constant 0.000000e+00 : f32
      %101 = vector.broadcast %cst_72 : f32 to vector<4x128xf32>
      %102 = arith.maximumf %100, %101 : vector<4x128xf32>
      %103 = arith.subf %99, %102 : vector<4x128xf32>
      %cst_73 = arith.constant 9.99999974E-5 : f32
      %104 = vector.broadcast %cst_73 : f32 to vector<4x128xf32>
      %105 = arith.maximumf %103, %104 : vector<4x128xf32>
      %106 = arith.mulf %10, %105 : vector<4x128xf32>
      %107 = arith.subf %105, %106 : vector<4x128xf32>
      %cst_74 = arith.constant 9.99999974E-5 : f32
      %108 = vector.broadcast %cst_74 : f32 to vector<4x128xf32>
      %109 = arith.maximumf %107, %108 : vector<4x128xf32>
      %110 = arith.subf %18, %62 : vector<4x128xf32>
      %111 = arith.subf %20, %63 : vector<4x128xf32>
      %112 = arith.addf %110, %111 : vector<4x128xf32>
      %113 = arith.subf %22, %64 : vector<4x128xf32>
      %114 = arith.addf %112, %113 : vector<4x128xf32>
      %cst_75 = arith.constant 0.000000e+00 : f32
      %115 = vector.broadcast %cst_75 : f32 to vector<4x128xf32>
      %116 = arith.maximumf %114, %115 : vector<4x128xf32>
      %117 = arith.mulf %116, %50 : vector<4x128xf32>
      %cst_76 = arith.constant 0.000000e+00 : f32
      %118 = vector.broadcast %cst_76 : f32 to vector<4x128xf32>
      %119 = arith.cmpf ogt, %117, %118 : vector<4x128xf32>
      %cst_77 = arith.constant 1.000000e-30 : f32
      %120 = vector.broadcast %cst_77 : f32 to vector<4x128xf32>
      %121 = arith.maximumf %117, %120 : vector<4x128xf32>
      %122 = math.log %121 : vector<4x128xf32>
      %123 = arith.mulf %16, %122 : vector<4x128xf32>
      %124 = math.exp %123 : vector<4x128xf32>
      %125 = arith.select %119, %124, %65 : vector<4x128xi1>, vector<4x128xf32>
      %126 = arith.mulf %14, %125 : vector<4x128xf32>
      %cst_78 = arith.constant 1.000000e+00 : f32
      %127 = vector.broadcast %cst_78 : f32 to vector<4x128xf32>
      %128 = arith.addf %127, %126 : vector<4x128xf32>
      %129 = arith.mulf %12, %128 : vector<4x128xf32>
      %130 = arith.mulf %129, %109 : vector<4x128xf32>
      %131 = arith.mulf %130, %32 : vector<4x128xf32>
      %132 = arith.minimumf %131, %109 : vector<4x128xf32>
      %133 = arith.subf %109, %132 : vector<4x128xf32>
      %cst_79 = arith.constant 9.99999974E-5 : f32
      %134 = vector.broadcast %cst_79 : f32 to vector<4x128xf32>
      %135 = arith.maximumf %133, %134 : vector<4x128xf32>
      %136 = vector.broadcast %59 : vector<1x128xf32> to vector<4x128xf32>
      %137 = arith.subf %136, %95 : vector<4x128xf32>
      %cst_80 = arith.constant 0.000000e+00 : f32
      %138 = vector.broadcast %cst_80 : f32 to vector<4x128xf32>
      %139 = arith.maximumf %137, %138 : vector<4x128xf32>
      %140 = arith.minimumf %139, %135 : vector<4x128xf32>
      %141 = arith.subf %135, %140 : vector<4x128xf32>
      %cst_81 = arith.constant 9.99999974E-5 : f32
      %142 = vector.broadcast %cst_81 : f32 to vector<4x128xf32>
      %143 = arith.maximumf %141, %142 : vector<4x128xf32>
      %cst_82 = arith.constant 0.000000e+00 : f32
      %144 = vector.broadcast %cst_82 : f32 to vector<4x128xf32>
      %145 = arith.subf %144, %62 : vector<4x128xf32>
      %146 = arith.mulf %145, %44 : vector<4x128xf32>
      %147 = arith.addf %63, %64 : vector<4x128xf32>
      %148 = arith.mulf %18, %147 : vector<4x128xf32>
      %149 = arith.addf %146, %148 : vector<4x128xf32>
      %150 = arith.mulf %149, %48 : vector<4x128xf32>
      %151 = arith.mulf %62, %38 : vector<4x128xf32>
      %152 = arith.addf %63, %64 : vector<4x128xf32>
      %153 = arith.mulf %152, %46 : vector<4x128xf32>
      %154 = arith.cmpf olt, %151, %153 : vector<4x128xf32>
      %155 = arith.mulf %20, %150 : vector<4x128xf32>
      %156 = arith.select %154, %155, %65 : vector<4x128xi1>, vector<4x128xf32>
      %157 = arith.minimumf %156, %63 : vector<4x128xf32>
      %158 = arith.subf %63, %157 : vector<4x128xf32>
      %cst_83 = arith.constant 9.99999974E-5 : f32
      %159 = vector.broadcast %cst_83 : f32 to vector<4x128xf32>
      %160 = arith.maximumf %158, %159 : vector<4x128xf32>
      %161 = arith.addf %62, %157 : vector<4x128xf32>
      %162 = arith.mulf %161, %38 : vector<4x128xf32>
      %163 = arith.addf %160, %64 : vector<4x128xf32>
      %164 = arith.mulf %163, %46 : vector<4x128xf32>
      %165 = arith.cmpf olt, %162, %164 : vector<4x128xf32>
      %166 = arith.mulf %22, %150 : vector<4x128xf32>
      %167 = arith.select %165, %166, %65 : vector<4x128xi1>, vector<4x128xf32>
      %168 = arith.minimumf %167, %64 : vector<4x128xf32>
      %169 = arith.subf %64, %168 : vector<4x128xf32>
      %cst_84 = arith.constant 9.99999974E-5 : f32
      %170 = vector.broadcast %cst_84 : f32 to vector<4x128xf32>
      %171 = arith.maximumf %169, %170 : vector<4x128xf32>
      %172 = arith.addf %161, %168 : vector<4x128xf32>
      %cst_85 = arith.constant 1.000000e+00 : f32
      %173 = vector.broadcast %cst_85 : f32 to vector<4x128xf32>
      %174 = arith.subf %173, %24 : vector<4x128xf32>
      %175 = arith.mulf %174, %132 : vector<4x128xf32>
      %176 = arith.mulf %24, %132 : vector<4x128xf32>
      %177 = arith.addf %172, %175 : vector<4x128xf32>
      %178 = arith.subf %177, %18 : vector<4x128xf32>
      %cst_86 = arith.constant 0.000000e+00 : f32
      %179 = vector.broadcast %cst_86 : f32 to vector<4x128xf32>
      %180 = arith.maximumf %178, %179 : vector<4x128xf32>
      %181 = arith.subf %177, %180 : vector<4x128xf32>
      %cst_87 = arith.constant 9.99999974E-5 : f32
      %182 = vector.broadcast %cst_87 : f32 to vector<4x128xf32>
      %183 = arith.maximumf %181, %182 : vector<4x128xf32>
      %cst_88 = arith.constant 0.000000e+00 : f32
      %184 = vector.broadcast %cst_88 : f32 to vector<4x128xf32>
      %185 = arith.cmpf ogt, %183, %184 : vector<4x128xf32>
      %186 = arith.addf %95, %140 : vector<4x128xf32>
      %187 = vector.broadcast %59 : vector<1x128xf32> to vector<4x128xf32>
      %188 = arith.cmpf ogt, %187, %186 : vector<4x128xf32>
      %189 = arith.andi %185, %188 : vector<4x128xi1>
      %190 = vector.broadcast %59 : vector<1x128xf32> to vector<4x128xf32>
      %191 = arith.subf %190, %95 : vector<4x128xf32>
      %192 = arith.subf %191, %140 : vector<4x128xf32>
      %193 = arith.mulf %192, %183 : vector<4x128xf32>
      %194 = arith.mulf %193, %52 : vector<4x128xf32>
      %195 = arith.select %189, %194, %65 : vector<4x128xi1>, vector<4x128xf32>
      %196 = arith.minimumf %195, %183 : vector<4x128xf32>
      %197 = arith.subf %183, %196 : vector<4x128xf32>
      %cst_89 = arith.constant 9.99999974E-5 : f32
      %198 = vector.broadcast %cst_89 : f32 to vector<4x128xf32>
      %199 = arith.maximumf %197, %198 : vector<4x128xf32>
      %200 = arith.subf %20, %160 : vector<4x128xf32>
      %201 = arith.mulf %200, %40 : vector<4x128xf32>
      %202 = arith.subf %22, %171 : vector<4x128xf32>
      %203 = arith.mulf %202, %42 : vector<4x128xf32>
      %204 = arith.addf %201, %203 : vector<4x128xf32>
      %cst_90 = arith.constant 9.99999974E-5 : f32
      %205 = vector.broadcast %cst_90 : f32 to vector<4x128xf32>
      %206 = arith.addf %204, %205 : vector<4x128xf32>
      %207 = tpu.reciprocal %206 {approx = true} : vector<4x128xf32> -> vector<4x128xf32>
      %208 = arith.mulf %201, %207 : vector<4x128xf32>
      %209 = arith.mulf %208, %176 : vector<4x128xf32>
      %210 = arith.mulf %201, %207 : vector<4x128xf32>
      %211 = arith.mulf %210, %180 : vector<4x128xf32>
      %212 = arith.addf %160, %209 : vector<4x128xf32>
      %213 = arith.addf %212, %211 : vector<4x128xf32>
      %214 = arith.mulf %26, %213 : vector<4x128xf32>
      %215 = arith.subf %213, %214 : vector<4x128xf32>
      %cst_91 = arith.constant 9.99999974E-5 : f32
      %216 = vector.broadcast %cst_91 : f32 to vector<4x128xf32>
      %217 = arith.maximumf %215, %216 : vector<4x128xf32>
      %218 = arith.subf %217, %20 : vector<4x128xf32>
      %cst_92 = arith.constant 0.000000e+00 : f32
      %219 = vector.broadcast %cst_92 : f32 to vector<4x128xf32>
      %220 = arith.maximumf %218, %219 : vector<4x128xf32>
      %221 = arith.subf %217, %220 : vector<4x128xf32>
      %cst_93 = arith.constant 9.99999974E-5 : f32
      %222 = vector.broadcast %cst_93 : f32 to vector<4x128xf32>
      %223 = arith.maximumf %221, %222 : vector<4x128xf32>
      %224 = arith.cmpf oge, %223, %20 : vector<4x128xf32>
      %cst_94 = arith.constant 9.99999974E-5 : f32
      %225 = vector.broadcast %cst_94 : f32 to vector<4x128xf32>
      %226 = arith.subf %20, %225 : vector<4x128xf32>
      %227 = arith.select %224, %226, %223 : vector<4x128xi1>, vector<4x128xf32>
      %228 = arith.addf %214, %220 : vector<4x128xf32>
      %229 = arith.subf %176, %209 : vector<4x128xf32>
      %cst_95 = arith.constant 0.000000e+00 : f32
      %230 = vector.broadcast %cst_95 : f32 to vector<4x128xf32>
      %231 = arith.maximumf %229, %230 : vector<4x128xf32>
      %232 = arith.subf %20, %227 : vector<4x128xf32>
      %233 = arith.mulf %232, %40 : vector<4x128xf32>
      %234 = arith.addf %233, %203 : vector<4x128xf32>
      %cst_96 = arith.constant 9.99999974E-5 : f32
      %235 = vector.broadcast %cst_96 : f32 to vector<4x128xf32>
      %236 = arith.addf %234, %235 : vector<4x128xf32>
      %237 = tpu.reciprocal %236 {approx = true} : vector<4x128xf32> -> vector<4x128xf32>
      %238 = arith.mulf %203, %237 : vector<4x128xf32>
      %239 = arith.mulf %238, %180 : vector<4x128xf32>
      %240 = arith.addf %171, %231 : vector<4x128xf32>
      %241 = arith.addf %240, %239 : vector<4x128xf32>
      %242 = arith.mulf %28, %241 : vector<4x128xf32>
      %243 = arith.subf %241, %242 : vector<4x128xf32>
      %cst_97 = arith.constant 9.99999974E-5 : f32
      %244 = vector.broadcast %cst_97 : f32 to vector<4x128xf32>
      %245 = arith.maximumf %243, %244 : vector<4x128xf32>
      %246 = arith.subf %245, %22 : vector<4x128xf32>
      %cst_98 = arith.constant 0.000000e+00 : f32
      %247 = vector.broadcast %cst_98 : f32 to vector<4x128xf32>
      %248 = arith.maximumf %246, %247 : vector<4x128xf32>
      %249 = arith.subf %245, %248 : vector<4x128xf32>
      %cst_99 = arith.constant 9.99999974E-5 : f32
      %250 = vector.broadcast %cst_99 : f32 to vector<4x128xf32>
      %251 = arith.maximumf %249, %250 : vector<4x128xf32>
      %252 = arith.cmpf oge, %251, %22 : vector<4x128xf32>
      %cst_100 = arith.constant 9.99999974E-5 : f32
      %253 = vector.broadcast %cst_100 : f32 to vector<4x128xf32>
      %254 = arith.subf %22, %253 : vector<4x128xf32>
      %255 = arith.select %252, %254, %251 : vector<4x128xi1>, vector<4x128xf32>
      %256 = arith.addf %242, %248 : vector<4x128xf32>
      %257 = arith.addf %67, %102 : vector<4x128xf32>
      %258 = arith.addf %228, %256 : vector<4x128xf32>
      %259 = arith.addf %95, %140 : vector<4x128xf32>
      %260 = arith.addf %259, %196 : vector<4x128xf32>
      %c0_101 = arith.constant 0 : index
      %c0_102 = arith.constant 0 : index
      %261 = vector.load %arg9[%c0_101, %c0_102] : memref<4x128xf32, #tpu.memory_space<vmem>>, vector<4x128xf32>
      tpu.vector_store %arg9[%c0_101, %c0_102], %98 {strides = array<i32>} : memref<4x128xf32, #tpu.memory_space<vmem>>, vector<4x128xf32>,
      %c0_103 = arith.constant 0 : index
      %c0_104 = arith.constant 0 : index
      %262 = vector.load %arg10[%c0_103, %c0_104] : memref<4x128xf32, #tpu.memory_space<vmem>>, vector<4x128xf32>
      tpu.vector_store %arg10[%c0_103, %c0_104], %143 {strides = array<i32>} : memref<4x128xf32, #tpu.memory_space<vmem>>, vector<4x128xf32>,
      %c0_105 = arith.constant 0 : index
      %c0_106 = arith.constant 0 : index
      %263 = vector.load %arg11[%c0_105, %c0_106] : memref<4x128xf32, #tpu.memory_space<vmem>>, vector<4x128xf32>
      tpu.vector_store %arg11[%c0_105, %c0_106], %199 {strides = array<i32>} : memref<4x128xf32, #tpu.memory_space<vmem>>, vector<4x128xf32>,
      %c0_107 = arith.constant 0 : index
      %c0_108 = arith.constant 0 : index
      %264 = vector.load %arg12[%c0_107, %c0_108] : memref<4x128xf32, #tpu.memory_space<vmem>>, vector<4x128xf32>
      tpu.vector_store %arg12[%c0_107, %c0_108], %227 {strides = array<i32>} : memref<4x128xf32, #tpu.memory_space<vmem>>, vector<4x128xf32>,
      %c0_109 = arith.constant 0 : index
      %c0_110 = arith.constant 0 : index
      %265 = vector.load %arg13[%c0_109, %c0_110] : memref<4x128xf32, #tpu.memory_space<vmem>>, vector<4x128xf32>
      tpu.vector_store %arg13[%c0_109, %c0_110], %255 {strides = array<i32>} : memref<4x128xf32, #tpu.memory_space<vmem>>, vector<4x128xf32>,
      %cst_111 = arith.constant dense<0.000000e+00> : vector<128xf32>
      %266 = vector.multi_reduction <add>, %257, %cst_111 [0] : vector<4x128xf32> to vector<128xf32>
      %267 = vector.shape_cast %266 : vector<128xf32> to vector<1x128xf32>
      %cst_112 = arith.constant 2.500000e-01 : f32
      %268 = vector.broadcast %cst_112 : f32 to vector<1x128xf32>
      %269 = arith.mulf %267, %268 : vector<1x128xf32>
      %270 = arith.index_cast %55 : i32 to index
      %c0_113 = arith.constant 0 : index
      %271 = vector.load %arg5[%270, %c0_113] : memref<24x128xf32, #tpu.memory_space<vmem>>, vector<1x128xf32>
      tpu.vector_store %arg5[%270, %c0_113], %269 {strides = array<i32>} : memref<24x128xf32, #tpu.memory_space<vmem>>, vector<1x128xf32>,
      %cst_114 = arith.constant dense<0.000000e+00> : vector<128xf32>
      %272 = vector.multi_reduction <add>, %106, %cst_114 [0] : vector<4x128xf32> to vector<128xf32>
      %273 = vector.shape_cast %272 : vector<128xf32> to vector<1x128xf32>
      %cst_115 = arith.constant 2.500000e-01 : f32
      %274 = vector.broadcast %cst_115 : f32 to vector<1x128xf32>
      %275 = arith.mulf %273, %274 : vector<1x128xf32>
      %276 = arith.index_cast %55 : i32 to index
      %c0_116 = arith.constant 0 : index
      %277 = vector.load %arg6[%276, %c0_116] : memref<24x128xf32, #tpu.memory_space<vmem>>, vector<1x128xf32>
      tpu.vector_store %arg6[%276, %c0_116], %275 {strides = array<i32>} : memref<24x128xf32, #tpu.memory_space<vmem>>, vector<1x128xf32>,
      %cst_117 = arith.constant dense<0.000000e+00> : vector<128xf32>
      %278 = vector.multi_reduction <add>, %258, %cst_117 [0] : vector<4x128xf32> to vector<128xf32>
      %279 = vector.shape_cast %278 : vector<128xf32> to vector<1x128xf32>
      %cst_118 = arith.constant 2.500000e-01 : f32
      %280 = vector.broadcast %cst_118 : f32 to vector<1x128xf32>
      %281 = arith.mulf %279, %280 : vector<1x128xf32>
      %282 = arith.index_cast %55 : i32 to index
      %c0_119 = arith.constant 0 : index
      %283 = vector.load %arg7[%282, %c0_119] : memref<24x128xf32, #tpu.memory_space<vmem>>, vector<1x128xf32>
      tpu.vector_store %arg7[%282, %c0_119], %281 {strides = array<i32>} : memref<24x128xf32, #tpu.memory_space<vmem>>, vector<1x128xf32>,
      %cst_120 = arith.constant dense<0.000000e+00> : vector<128xf32>
      %284 = vector.multi_reduction <add>, %260, %cst_120 [0] : vector<4x128xf32> to vector<128xf32>
      %285 = vector.shape_cast %284 : vector<128xf32> to vector<1x128xf32>
      %cst_121 = arith.constant 2.500000e-01 : f32
      %286 = vector.broadcast %cst_121 : f32 to vector<1x128xf32>
      %287 = arith.mulf %285, %286 : vector<1x128xf32>
      %288 = arith.index_cast %55 : i32 to index
      %c0_122 = arith.constant 0 : index
      %289 = vector.load %arg8[%288, %c0_122] : memref<24x128xf32, #tpu.memory_space<vmem>>, vector<1x128xf32>
      tpu.vector_store %arg8[%288, %c0_122], %287 {strides = array<i32>} : memref<24x128xf32, #tpu.memory_space<vmem>>, vector<1x128xf32>,
    }
    %c24_i32_52 = arith.constant 24 : i32
    return
  }
  func.func @transform_0(%arg0: i32, %arg1: i32) -> (i32, i32) {
    %c0_i32 = arith.constant 0 : i32
    return %arg1, %arg0 : i32, i32
  }
  func.func @transform_1(%arg0: i32, %arg1: i32) -> (i32, i32) {
    %c0_i32 = arith.constant 0 : i32
    return %arg1, %arg0 : i32, i32
  }
  func.func @transform_2(%arg0: i32, %arg1: i32) -> (i32, i32, i32) {
    %c0_i32 = arith.constant 0 : i32
    %c0_i32_0 = arith.constant 0 : i32
    %c0_i32_1 = arith.constant 0 : i32
    return %c0_i32, %c0_i32_0, %arg0 : i32, i32, i32
  }
  func.func @transform_3(%arg0: i32, %arg1: i32) -> (i32, i32) {
    %c0_i32 = arith.constant 0 : i32
    return %arg1, %arg0 : i32, i32
  }
  func.func @transform_4(%arg0: i32, %arg1: i32) -> (i32, i32) {
    %c0_i32 = arith.constant 0 : i32
    return %arg1, %arg0 : i32, i32
  }
  func.func @transform_5(%arg0: i32, %arg1: i32) -> (i32, i32) {
    %c0_i32 = arith.constant 0 : i32
    return %arg1, %arg0 : i32, i32
  }
  func.func @transform_6(%arg0: i32, %arg1: i32) -> (i32, i32) {
    %c0_i32 = arith.constant 0 : i32
    return %arg1, %arg0 : i32, i32
  }
}

module attributes {stable_mosaic.version = 11 : i64} {
  func.func @_uh_conv_kernel(%arg0: i32, %arg1: memref<24x128xf32, #tpu.memory_space<vmem>>, %arg2: memref<24x15xf32, #tpu.memory_space<vmem>>, %arg3: memref<24x128xf32, #tpu.memory_space<vmem>>) attributes {dimension_semantics = [#tpu.dimension_semantics<parallel>], iteration_bounds = array<i64: 1>, scalar_prefetch = 0 : i64, scratch_operands = 0 : i64, tpu.core_type = #tpu.core_type<tc>, window_params = [{transform_indices = @transform_0, window_bounds = array<i64: 24, 128>}, {transform_indices = @transform_1, window_bounds = array<i64: 24, 15>}, {transform_indices = @transform_2, window_bounds = array<i64: 24, 128>}]} {
    %c0 = arith.constant 0 : index
    %c0_0 = arith.constant 0 : index
    %0 = vector.load %arg1[%c0, %c0_0] : memref<24x128xf32, #tpu.memory_space<vmem>>, vector<24x128xf32>
    %c0_1 = arith.constant 0 : index
    %c0_2 = arith.constant 0 : index
    %1 = vector.load %arg2[%c0_1, %c0_2] : memref<24x15xf32, #tpu.memory_space<vmem>>, vector<24x1xf32>
    %2 = vector.broadcast %1 : vector<24x1xf32> to vector<24x128xf32>
    %3 = arith.mulf %2, %0 : vector<24x128xf32>
    %c0_3 = arith.constant 0 : index
    %c1 = arith.constant 1 : index
    %4 = vector.load %arg2[%c0_3, %c1] : memref<24x15xf32, #tpu.memory_space<vmem>>, vector<24x1xf32>
    %c1_i32 = arith.constant 1 : i32
    %5 = tpu.dynamic_rotate %0 by %c1_i32 dim 1 : vector<24x128xf32>, i32 -> vector<24x128xf32>
    %6 = vector.broadcast %4 : vector<24x1xf32> to vector<24x128xf32>
    %7 = arith.mulf %6, %5 : vector<24x128xf32>
    %8 = arith.addf %3, %7 : vector<24x128xf32>
    %c0_4 = arith.constant 0 : index
    %c2 = arith.constant 2 : index
    %9 = vector.load %arg2[%c0_4, %c2] : memref<24x15xf32, #tpu.memory_space<vmem>>, vector<24x1xf32>
    %c2_i32 = arith.constant 2 : i32
    %10 = tpu.dynamic_rotate %0 by %c2_i32 dim 1 : vector<24x128xf32>, i32 -> vector<24x128xf32>
    %11 = vector.broadcast %9 : vector<24x1xf32> to vector<24x128xf32>
    %12 = arith.mulf %11, %10 : vector<24x128xf32>
    %13 = arith.addf %8, %12 : vector<24x128xf32>
    %c0_5 = arith.constant 0 : index
    %c3 = arith.constant 3 : index
    %14 = vector.load %arg2[%c0_5, %c3] : memref<24x15xf32, #tpu.memory_space<vmem>>, vector<24x1xf32>
    %c3_i32 = arith.constant 3 : i32
    %15 = tpu.dynamic_rotate %0 by %c3_i32 dim 1 : vector<24x128xf32>, i32 -> vector<24x128xf32>
    %16 = vector.broadcast %14 : vector<24x1xf32> to vector<24x128xf32>
    %17 = arith.mulf %16, %15 : vector<24x128xf32>
    %18 = arith.addf %13, %17 : vector<24x128xf32>
    %c0_6 = arith.constant 0 : index
    %c4 = arith.constant 4 : index
    %19 = vector.load %arg2[%c0_6, %c4] : memref<24x15xf32, #tpu.memory_space<vmem>>, vector<24x1xf32>
    %c4_i32 = arith.constant 4 : i32
    %20 = tpu.dynamic_rotate %0 by %c4_i32 dim 1 : vector<24x128xf32>, i32 -> vector<24x128xf32>
    %21 = vector.broadcast %19 : vector<24x1xf32> to vector<24x128xf32>
    %22 = arith.mulf %21, %20 : vector<24x128xf32>
    %23 = arith.addf %18, %22 : vector<24x128xf32>
    %c0_7 = arith.constant 0 : index
    %c5 = arith.constant 5 : index
    %24 = vector.load %arg2[%c0_7, %c5] : memref<24x15xf32, #tpu.memory_space<vmem>>, vector<24x1xf32>
    %c5_i32 = arith.constant 5 : i32
    %25 = tpu.dynamic_rotate %0 by %c5_i32 dim 1 : vector<24x128xf32>, i32 -> vector<24x128xf32>
    %26 = vector.broadcast %24 : vector<24x1xf32> to vector<24x128xf32>
    %27 = arith.mulf %26, %25 : vector<24x128xf32>
    %28 = arith.addf %23, %27 : vector<24x128xf32>
    %c0_8 = arith.constant 0 : index
    %c6 = arith.constant 6 : index
    %29 = vector.load %arg2[%c0_8, %c6] : memref<24x15xf32, #tpu.memory_space<vmem>>, vector<24x1xf32>
    %c6_i32 = arith.constant 6 : i32
    %30 = tpu.dynamic_rotate %0 by %c6_i32 dim 1 : vector<24x128xf32>, i32 -> vector<24x128xf32>
    %31 = vector.broadcast %29 : vector<24x1xf32> to vector<24x128xf32>
    %32 = arith.mulf %31, %30 : vector<24x128xf32>
    %33 = arith.addf %28, %32 : vector<24x128xf32>
    %c0_9 = arith.constant 0 : index
    %c7 = arith.constant 7 : index
    %34 = vector.load %arg2[%c0_9, %c7] : memref<24x15xf32, #tpu.memory_space<vmem>>, vector<24x1xf32>
    %c7_i32 = arith.constant 7 : i32
    %35 = tpu.dynamic_rotate %0 by %c7_i32 dim 1 : vector<24x128xf32>, i32 -> vector<24x128xf32>
    %36 = vector.broadcast %34 : vector<24x1xf32> to vector<24x128xf32>
    %37 = arith.mulf %36, %35 : vector<24x128xf32>
    %38 = arith.addf %33, %37 : vector<24x128xf32>
    %c0_10 = arith.constant 0 : index
    %c8 = arith.constant 8 : index
    %39 = vector.load %arg2[%c0_10, %c8] : memref<24x15xf32, #tpu.memory_space<vmem>>, vector<24x1xf32>
    %c8_i32 = arith.constant 8 : i32
    %40 = tpu.dynamic_rotate %0 by %c8_i32 dim 1 : vector<24x128xf32>, i32 -> vector<24x128xf32>
    %41 = vector.broadcast %39 : vector<24x1xf32> to vector<24x128xf32>
    %42 = arith.mulf %41, %40 : vector<24x128xf32>
    %43 = arith.addf %38, %42 : vector<24x128xf32>
    %c0_11 = arith.constant 0 : index
    %c9 = arith.constant 9 : index
    %44 = vector.load %arg2[%c0_11, %c9] : memref<24x15xf32, #tpu.memory_space<vmem>>, vector<24x1xf32>
    %c9_i32 = arith.constant 9 : i32
    %45 = tpu.dynamic_rotate %0 by %c9_i32 dim 1 : vector<24x128xf32>, i32 -> vector<24x128xf32>
    %46 = vector.broadcast %44 : vector<24x1xf32> to vector<24x128xf32>
    %47 = arith.mulf %46, %45 : vector<24x128xf32>
    %48 = arith.addf %43, %47 : vector<24x128xf32>
    %c0_12 = arith.constant 0 : index
    %c10 = arith.constant 10 : index
    %49 = vector.load %arg2[%c0_12, %c10] : memref<24x15xf32, #tpu.memory_space<vmem>>, vector<24x1xf32>
    %c10_i32 = arith.constant 10 : i32
    %50 = tpu.dynamic_rotate %0 by %c10_i32 dim 1 : vector<24x128xf32>, i32 -> vector<24x128xf32>
    %51 = vector.broadcast %49 : vector<24x1xf32> to vector<24x128xf32>
    %52 = arith.mulf %51, %50 : vector<24x128xf32>
    %53 = arith.addf %48, %52 : vector<24x128xf32>
    %c0_13 = arith.constant 0 : index
    %c11 = arith.constant 11 : index
    %54 = vector.load %arg2[%c0_13, %c11] : memref<24x15xf32, #tpu.memory_space<vmem>>, vector<24x1xf32>
    %c11_i32 = arith.constant 11 : i32
    %55 = tpu.dynamic_rotate %0 by %c11_i32 dim 1 : vector<24x128xf32>, i32 -> vector<24x128xf32>
    %56 = vector.broadcast %54 : vector<24x1xf32> to vector<24x128xf32>
    %57 = arith.mulf %56, %55 : vector<24x128xf32>
    %58 = arith.addf %53, %57 : vector<24x128xf32>
    %c0_14 = arith.constant 0 : index
    %c12 = arith.constant 12 : index
    %59 = vector.load %arg2[%c0_14, %c12] : memref<24x15xf32, #tpu.memory_space<vmem>>, vector<24x1xf32>
    %c12_i32 = arith.constant 12 : i32
    %60 = tpu.dynamic_rotate %0 by %c12_i32 dim 1 : vector<24x128xf32>, i32 -> vector<24x128xf32>
    %61 = vector.broadcast %59 : vector<24x1xf32> to vector<24x128xf32>
    %62 = arith.mulf %61, %60 : vector<24x128xf32>
    %63 = arith.addf %58, %62 : vector<24x128xf32>
    %c0_15 = arith.constant 0 : index
    %c13 = arith.constant 13 : index
    %64 = vector.load %arg2[%c0_15, %c13] : memref<24x15xf32, #tpu.memory_space<vmem>>, vector<24x1xf32>
    %c13_i32 = arith.constant 13 : i32
    %65 = tpu.dynamic_rotate %0 by %c13_i32 dim 1 : vector<24x128xf32>, i32 -> vector<24x128xf32>
    %66 = vector.broadcast %64 : vector<24x1xf32> to vector<24x128xf32>
    %67 = arith.mulf %66, %65 : vector<24x128xf32>
    %68 = arith.addf %63, %67 : vector<24x128xf32>
    %c0_16 = arith.constant 0 : index
    %c14 = arith.constant 14 : index
    %69 = vector.load %arg2[%c0_16, %c14] : memref<24x15xf32, #tpu.memory_space<vmem>>, vector<24x1xf32>
    %c14_i32 = arith.constant 14 : i32
    %70 = tpu.dynamic_rotate %0 by %c14_i32 dim 1 : vector<24x128xf32>, i32 -> vector<24x128xf32>
    %71 = vector.broadcast %69 : vector<24x1xf32> to vector<24x128xf32>
    %72 = arith.mulf %71, %70 : vector<24x128xf32>
    %73 = arith.addf %68, %72 : vector<24x128xf32>
    %c0_17 = arith.constant 0 : index
    %c0_18 = arith.constant 0 : index
    %74 = vector.load %arg3[%c0_17, %c0_18] : memref<24x128xf32, #tpu.memory_space<vmem>>, vector<24x128xf32>
    tpu.vector_store %arg3[%c0_17, %c0_18], %73 {strides = array<i32>} : memref<24x128xf32, #tpu.memory_space<vmem>>, vector<24x128xf32>,
    return
  }
  func.func @transform_0(%arg0: i32) -> (i32, i32) {
    %c0_i32 = arith.constant 0 : i32
    %c0_i32_0 = arith.constant 0 : i32
    return %arg0, %c0_i32 : i32, i32
  }
  func.func @transform_1(%arg0: i32) -> (i32, i32) {
    %c0_i32 = arith.constant 0 : i32
    %c0_i32_0 = arith.constant 0 : i32
    return %arg0, %c0_i32 : i32, i32
  }
  func.func @transform_2(%arg0: i32) -> (i32, i32) {
    %c0_i32 = arith.constant 0 : i32
    %c0_i32_0 = arith.constant 0 : i32
    return %arg0, %c0_i32 : i32, i32
  }
}

</mosaic_0001>

<llo_original>
// kernel: sacsma_forward.3
$region0: #{sacsma_forward.3}
  #allocation0 [shape = 'u32[]', space=smem, size = 0x4, offset = 0x4, fixed_abs, tag = 'smem constant byte address 0x4 - core index']
  #allocation1 [shape = 'u32[144,128]{1,0:T(1,128)}', space=vmem, size = 0x12000, scoped, tag = 'internal scratch']
  %s0 = inlined_call_operand.vmem [shape: f32[24,128], index: 0, kind: input, shape index: {}]
  %s1 = inlined_call_operand.vmem [shape: f32[24,15], index: 1, kind: input, shape index: {}]
  %s2 = inlined_call_operand.vmem [shape: f32[24,128], index: 2, kind: output, shape index: {}]
  %s3 = sld [smem:[#allocation0]]
  $region18: #{sacsma_forward.3} parent=0
    _
  %s5 = ssub.s32 1, %s3
  %s6 = scalar_select 0, %s5, %s3
  // Predicated region
  $region2: #{sacsma_forward.3} parent=0 // pred_check
    _
  $region3: #{sacsma_forward.3} parent=0 // pred_check_branch
    %8 = sbr.rel (0) target = $region5
  $region4: #{sacsma_forward.3} parent=0 // pred_region
    _
  $region5: #{sacsma_forward.3} parent=0 // pred_fallthru
    _
  // Predicated region
  $region6: #{sacsma_forward.3} parent=0 // pred_check
    _
  $region7: #{sacsma_forward.3} parent=0 // pred_check_branch
    %10 = sbr.rel (0) target = $region9
  $region8: #{sacsma_forward.3} parent=0 // pred_region
    _
  $region9: #{sacsma_forward.3} parent=0 // pred_fallthru
    _
  %v11 = vld [vmem:[%s0] sm:$0xff]
  %v12 = vld [vmem:[%s0 + $0x8] sm:$0xff]
  %v13 = vld [vmem:[%s0 + $0x10] sm:$0xff]
  %v14 = vld [vmem:[%s1] sm:$0xff]
  %v15 = vld [vmem:[%s1 + $0x8] sm:$0xff]
  %v16 = vld [vmem:[%s1 + $0x10] sm:$0xff]
  %18 = vset.pattern.permute.xlu0 0
  %19 = vperm.xlu0 %18, %v14
  %v20 = vpop.permute.xlu0 %19
  %23 = vset.pattern.permute.xlu0 0
  %24 = vperm.xlu0 %23, %v15
  %v25 = vpop.permute.xlu0 %24
  %28 = vset.pattern.permute.xlu0 0
  %29 = vperm.xlu0 %28, %v16
  %v30 = vpop.permute.xlu0 %29
  %v32 = vmul.f32 %v20, %v11
  %v33 = vmul.f32 %v25, %v12
  %v34 = vmul.f32 %v30, %v13
  %35 = vrot.lane.b32.xlu0 %v11, 1
  %v36 = vpop.permute.xlu0 %35
  %37 = vrot.lane.b32.xlu0 %v12, 1
  %v38 = vpop.permute.xlu0 %37
  %39 = vrot.lane.b32.xlu0 %v13, 1
  %v40 = vpop.permute.xlu0 %39
  %41 = vset.pattern.permute.xlu0 1
  %42 = vperm.xlu0 %41, %v14
  %v43 = vpop.permute.xlu0 %42
  %45 = vset.pattern.permute.xlu0 1
  %46 = vperm.xlu0 %45, %v15
  %v47 = vpop.permute.xlu0 %46
  %49 = vset.pattern.permute.xlu0 1
  %50 = vperm.xlu0 %49, %v16
  %v51 = vpop.permute.xlu0 %50
  %v53 = vmul.f32 %v43, %v36
  %v54 = vmul.f32 %v47, %v38
  %v55 = vmul.f32 %v51, %v40
  %v56 = vadd.f32 %v32, %v53
  %v57 = vadd.f32 %v33, %v54
  %v58 = vadd.f32 %v34, %v55
  %59 = vrot.lane.b32.xlu0 %v11, 2
  %v60 = vpop.permute.xlu0 %59
  %61 = vrot.lane.b32.xlu0 %v12, 2
  %v62 = vpop.permute.xlu0 %61
  %63 = vrot.lane.b32.xlu0 %v13, 2
  %v64 = vpop.permute.xlu0 %63
  %65 = vset.pattern.permute.xlu0 2
  %66 = vperm.xlu0 %65, %v14
  %v67 = vpop.permute.xlu0 %66
  %69 = vset.pattern.permute.xlu0 2
  %70 = vperm.xlu0 %69, %v15
  %v71 = vpop.permute.xlu0 %70
  %73 = vset.pattern.permute.xlu0 2
  %74 = vperm.xlu0 %73, %v16
  %v75 = vpop.permute.xlu0 %74
  %v77 = vmul.f32 %v67, %v60
  %v78 = vmul.f32 %v71, %v62
  %v79 = vmul.f32 %v75, %v64
  %v80 = vadd.f32 %v56, %v77
  %v81 = vadd.f32 %v57, %v78
  %v82 = vadd.f32 %v58, %v79
  %83 = vrot.lane.b32.xlu0 %v11, 3
  %v84 = vpop.permute.xlu0 %83
  %85 = vrot.lane.b32.xlu0 %v12, 3
  %v86 = vpop.permute.xlu0 %85
  %87 = vrot.lane.b32.xlu0 %v13, 3
  %v88 = vpop.permute.xlu0 %87
  %89 = vset.pattern.permute.xlu0 3
  %90 = vperm.xlu0 %89, %v14
  %v91 = vpop.permute.xlu0 %90
  %93 = vset.pattern.permute.xlu0 3
  %94 = vperm.xlu0 %93, %v15
  %v95 = vpop.permute.xlu0 %94
  %97 = vset.pattern.permute.xlu0 3
  %98 = vperm.xlu0 %97, %v16
  %v99 = vpop.permute.xlu0 %98
  %v101 = vmul.f32 %v91, %v84
  %v102 = vmul.f32 %v95, %v86
  %v103 = vmul.f32 %v99, %v88
  %v104 = vadd.f32 %v80, %v101
  %v105 = vadd.f32 %v81, %v102
  %v106 = vadd.f32 %v82, %v103
  %107 = vrot.lane.b32.xlu0 %v11, 4
  %v108 = vpop.permute.xlu0 %107
  %109 = vrot.lane.b32.xlu0 %v12, 4
  %v110 = vpop.permute.xlu0 %109
  %111 = vrot.lane.b32.xlu0 %v13, 4
  %v112 = vpop.permute.xlu0 %111
  %113 = vset.pattern.permute.xlu0 4
  %114 = vperm.xlu0 %113, %v14
  %v115 = vpop.permute.xlu0 %114
  %117 = vset.pattern.permute.xlu0 4
  %118 = vperm.xlu0 %117, %v15
  %v119 = vpop.permute.xlu0 %118
  %121 = vset.pattern.permute.xlu0 4
  %122 = vperm.xlu0 %121, %v16
  %v123 = vpop.permute.xlu0 %122
  %v125 = vmul.f32 %v115, %v108
  %v126 = vmul.f32 %v119, %v110
  %v127 = vmul.f32 %v123, %v112
  %v128 = vadd.f32 %v104, %v125
  %v129 = vadd.f32 %v105, %v126
  %v130 = vadd.f32 %v106, %v127
  %131 = vrot.lane.b32.xlu0 %v11, 5
  %v132 = vpop.permute.xlu0 %131
  %133 = vrot.lane.b32.xlu0 %v12, 5
  %v134 = vpop.permute.xlu0 %133
  %135 = vrot.lane.b32.xlu0 %v13, 5
  %v136 = vpop.permute.xlu0 %135
  %137 = vset.pattern.permute.xlu0 5
  %138 = vperm.xlu0 %137, %v14
  %v139 = vpop.permute.xlu0 %138
  %141 = vset.pattern.permute.xlu0 5
  %142 = vperm.xlu0 %141, %v15
  %v143 = vpop.permute.xlu0 %142
  %145 = vset.pattern.permute.xlu0 5
  %146 = vperm.xlu0 %145, %v16
  %v147 = vpop.permute.xlu0 %146
  %v149 = vmul.f32 %v139, %v132
  %v150 = vmul.f32 %v143, %v134
  %v151 = vmul.f32 %v147, %v136
  %v152 = vadd.f32 %v128, %v149
  %v153 = vadd.f32 %v129, %v150
  %v154 = vadd.f32 %v130, %v151
  %155 = vrot.lane.b32.xlu0 %v11, 6
  %v156 = vpop.permute.xlu0 %155
  %157 = vrot.lane.b32.xlu0 %v12, 6
  %v158 = vpop.permute.xlu0 %157
  %159 = vrot.lane.b32.xlu0 %v13, 6
  %v160 = vpop.permute.xlu0 %159
  %161 = vset.pattern.permute.xlu0 6
  %162 = vperm.xlu0 %161, %v14
  %v163 = vpop.permute.xlu0 %162
  %165 = vset.pattern.permute.xlu0 6
  %166 = vperm.xlu0 %165, %v15
  %v167 = vpop.permute.xlu0 %166
  %169 = vset.pattern.permute.xlu0 6
  %170 = vperm.xlu0 %169, %v16
  %v171 = vpop.permute.xlu0 %170
  %v173 = vmul.f32 %v163, %v156
  %v174 = vmul.f32 %v167, %v158
  %v175 = vmul.f32 %v171, %v160
  %v176 = vadd.f32 %v152, %v173
  %v177 = vadd.f32 %v153, %v174
  %v178 = vadd.f32 %v154, %v175
  %179 = vrot.lane.b32.xlu0 %v11, 7
  %v180 = vpop.permute.xlu0 %179
  %181 = vrot.lane.b32.xlu0 %v12, 7
  %v182 = vpop.permute.xlu0 %181
  %183 = vrot.lane.b32.xlu0 %v13, 7
  %v184 = vpop.permute.xlu0 %183
  %185 = vset.pattern.permute.xlu0 7
  %186 = vperm.xlu0 %185, %v14
  %v187 = vpop.permute.xlu0 %186
  %189 = vset.pattern.permute.xlu0 7
  %190 = vperm.xlu0 %189, %v15
  %v191 = vpop.permute.xlu0 %190
  %193 = vset.pattern.permute.xlu0 7
  %194 = vperm.xlu0 %193, %v16
  %v195 = vpop.permute.xlu0 %194
  %v197 = vmul.f32 %v187, %v180
  %v198 = vmul.f32 %v191, %v182
  %v199 = vmul.f32 %v195, %v184
  %v200 = vadd.f32 %v176, %v197
  %v201 = vadd.f32 %v177, %v198
  %v202 = vadd.f32 %v178, %v199
  %203 = vrot.lane.b32.xlu0 %v11, 8
  %v204 = vpop.permute.xlu0 %203
  %205 = vrot.lane.b32.xlu0 %v12, 8
  %v206 = vpop.permute.xlu0 %205
  %207 = vrot.lane.b32.xlu0 %v13, 8
  %v208 = vpop.permute.xlu0 %207
  %209 = vset.pattern.permute.xlu0 8
  %210 = vperm.xlu0 %209, %v14
  %v211 = vpop.permute.xlu0 %210
  %213 = vset.pattern.permute.xlu0 8
  %214 = vperm.xlu0 %213, %v15
  %v215 = vpop.permute.xlu0 %214
  %217 = vset.pattern.permute.xlu0 8
  %218 = vperm.xlu0 %217, %v16
  %v219 = vpop.permute.xlu0 %218
  %v221 = vmul.f32 %v211, %v204
  %v222 = vmul.f32 %v215, %v206
  %v223 = vmul.f32 %v219, %v208
  %v224 = vadd.f32 %v200, %v221
  %v225 = vadd.f32 %v201, %v222
  %v226 = vadd.f32 %v202, %v223
  %227 = vrot.lane.b32.xlu0 %v11, 9
  %v228 = vpop.permute.xlu0 %227
  %229 = vrot.lane.b32.xlu0 %v12, 9
  %v230 = vpop.permute.xlu0 %229
  %231 = vrot.lane.b32.xlu0 %v13, 9
  %v232 = vpop.permute.xlu0 %231
  %233 = vset.pattern.permute.xlu0 9
  %234 = vperm.xlu0 %233, %v14
  %v235 = vpop.permute.xlu0 %234
  %237 = vset.pattern.permute.xlu0 9
  %238 = vperm.xlu0 %237, %v15
  %v239 = vpop.permute.xlu0 %238
  %241 = vset.pattern.permute.xlu0 9
  %242 = vperm.xlu0 %241, %v16
  %v243 = vpop.permute.xlu0 %242
  %v245 = vmul.f32 %v235, %v228
  %v246 = vmul.f32 %v239, %v230
  %v247 = vmul.f32 %v243, %v232
  %v248 = vadd.f32 %v224, %v245
  %v249 = vadd.f32 %v225, %v246
  %v250 = vadd.f32 %v226, %v247
  %251 = vrot.lane.b32.xlu0 %v11, 10
  %v252 = vpop.permute.xlu0 %251
  %253 = vrot.lane.b32.xlu0 %v12, 10
  %v254 = vpop.permute.xlu0 %253
  %255 = vrot.lane.b32.xlu0 %v13, 10
  %v256 = vpop.permute.xlu0 %255
  %257 = vset.pattern.permute.xlu0 10
  %258 = vperm.xlu0 %257, %v14
  %v259 = vpop.permute.xlu0 %258
  %261 = vset.pattern.permute.xlu0 10
  %262 = vperm.xlu0 %261, %v15
  %v263 = vpop.permute.xlu0 %262
  %265 = vset.pattern.permute.xlu0 10
  %266 = vperm.xlu0 %265, %v16
  %v267 = vpop.permute.xlu0 %266
  %v269 = vmul.f32 %v259, %v252
  %v270 = vmul.f32 %v263, %v254
  %v271 = vmul.f32 %v267, %v256
  %v272 = vadd.f32 %v248, %v269
  %v273 = vadd.f32 %v249, %v270
  %v274 = vadd.f32 %v250, %v271
  %275 = vrot.lane.b32.xlu0 %v11, 11
  %v276 = vpop.permute.xlu0 %275
  %277 = vrot.lane.b32.xlu0 %v12, 11
  %v278 = vpop.permute.xlu0 %277
  %279 = vrot.lane.b32.xlu0 %v13, 11
  %v280 = vpop.permute.xlu0 %279
  %281 = vset.pattern.permute.xlu0 11
  %282 = vperm.xlu0 %281, %v14
  %v283 = vpop.permute.xlu0 %282
  %285 = vset.pattern.permute.xlu0 11
  %286 = vperm.xlu0 %285, %v15
  %v287 = vpop.permute.xlu0 %286
  %289 = vset.pattern.permute.xlu0 11
  %290 = vperm.xlu0 %289, %v16
  %v291 = vpop.permute.xlu0 %290
  %v293 = vmul.f32 %v283, %v276
  %v294 = vmul.f32 %v287, %v278
  %v295 = vmul.f32 %v291, %v280
  %v296 = vadd.f32 %v272, %v293
  %v297 = vadd.f32 %v273, %v294
  %v298 = vadd.f32 %v274, %v295
  %299 = vrot.lane.b32.xlu0 %v11, 12
  %v300 = vpop.permute.xlu0 %299
  %301 = vrot.lane.b32.xlu0 %v12, 12
  %v302 = vpop.permute.xlu0 %301
  %303 = vrot.lane.b32.xlu0 %v13, 12
  %v304 = vpop.permute.xlu0 %303
  %305 = vset.pattern.permute.xlu0 12
  %306 = vperm.xlu0 %305, %v14
  %v307 = vpop.permute.xlu0 %306
  %309 = vset.pattern.permute.xlu0 12
  %310 = vperm.xlu0 %309, %v15
  %v311 = vpop.permute.xlu0 %310
  %313 = vset.pattern.permute.xlu0 12
  %314 = vperm.xlu0 %313, %v16
  %v315 = vpop.permute.xlu0 %314
  %v317 = vmul.f32 %v307, %v300
  %v318 = vmul.f32 %v311, %v302
  %v319 = vmul.f32 %v315, %v304
  %v320 = vadd.f32 %v296, %v317
  %v321 = vadd.f32 %v297, %v318
  %v322 = vadd.f32 %v298, %v319
  %323 = vrot.lane.b32.xlu0 %v11, 13
  %v324 = vpop.permute.xlu0 %323
  %325 = vrot.lane.b32.xlu0 %v12, 13
  %v326 = vpop.permute.xlu0 %325
  %327 = vrot.lane.b32.xlu0 %v13, 13
  %v328 = vpop.permute.xlu0 %327
  %329 = vset.pattern.permute.xlu0 13
  %330 = vperm.xlu0 %329, %v14
  %v331 = vpop.permute.xlu0 %330
  %333 = vset.pattern.permute.xlu0 13
  %334 = vperm.xlu0 %333, %v15
  %v335 = vpop.permute.xlu0 %334
  %337 = vset.pattern.permute.xlu0 13
  %338 = vperm.xlu0 %337, %v16
  %v339 = vpop.permute.xlu0 %338
  %v341 = vmul.f32 %v331, %v324
  %v342 = vmul.f32 %v335, %v326
  %v343 = vmul.f32 %v339, %v328
  %v344 = vadd.f32 %v320, %v341
  %v345 = vadd.f32 %v321, %v342
  %v346 = vadd.f32 %v322, %v343
  %347 = vrot.lane.b32.xlu0 %v11, 14
  %v348 = vpop.permute.xlu0 %347
  %349 = vrot.lane.b32.xlu0 %v12, 14
  %v350 = vpop.permute.xlu0 %349
  %351 = vrot.lane.b32.xlu0 %v13, 14
  %v352 = vpop.permute.xlu0 %351
  %353 = vset.pattern.permute.xlu0 14
  %354 = vperm.xlu0 %353, %v14
  %v355 = vpop.permute.xlu0 %354
  %357 = vset.pattern.permute.xlu0 14
  %358 = vperm.xlu0 %357, %v15
  %v359 = vpop.permute.xlu0 %358
  %361 = vset.pattern.permute.xlu0 14
  %362 = vperm.xlu0 %361, %v16
  %v363 = vpop.permute.xlu0 %362
  %v365 = vmul.f32 %v355, %v348
  %v366 = vmul.f32 %v359, %v350
  %v367 = vmul.f32 %v363, %v352
  %v368 = vadd.f32 %v344, %v365
  %v369 = vadd.f32 %v345, %v366
  %v370 = vadd.f32 %v346, %v367
  %371 = vst [vmem:[%s2] sm:$0xff] %v368
  %372 = vst [vmem:[%s2 + $0x8] sm:$0xff] %v369
  %373 = vst [vmem:[%s2 + $0x10] sm:$0xff] %v370
  // Predicated region
  $region10: #{sacsma_forward.3} parent=0 // pred_check
    _
  $region11: #{sacsma_forward.3} parent=0 // pred_check_branch
    %375 = sbr.rel (0) target = $region13
  $region12: #{sacsma_forward.3} parent=0 // pred_region
    _
  $region13: #{sacsma_forward.3} parent=0 // pred_fallthru
    _
  // Predicated region
  $region14: #{sacsma_forward.3} parent=0 // pred_check
    _
  $region15: #{sacsma_forward.3} parent=0 // pred_check_branch
    %377 = sbr.rel (0) target = $region17
  $region16: #{sacsma_forward.3} parent=0 // pred_region
    _
  $region17: #{sacsma_forward.3} parent=0 // pred_fallthru
    _

// kernel: sacsma_forward.2
$region0: #{sacsma_forward.2}
  #allocation0 [shape = 'u32[]', space=smem, size = 0x4, offset = 0x4, fixed_abs, tag = 'smem constant byte address 0x4 - core index']
  #allocation1 [shape = 'u32[144,128]{1,0:T(1,128)}', space=vmem, size = 0x12000, scoped, tag = 'internal scratch']
  #allocation2 [shape = 'f32[4,128]{1,0:T(4,128)}', space=vmem, size = 0x800, scoped, tag = 'scratch operand']
  #allocation3 [shape = 'f32[4,128]{1,0:T(4,128)}', space=vmem, size = 0x800, scoped, tag = 'scratch operand']
  #allocation4 [shape = 'f32[4,128]{1,0:T(4,128)}', space=vmem, size = 0x800, scoped, tag = 'scratch operand']
  #allocation5 [shape = 'f32[4,128]{1,0:T(4,128)}', space=vmem, size = 0x800, scoped, tag = 'scratch operand']
  #allocation6 [shape = 'f32[4,128]{1,0:T(4,128)}', space=vmem, size = 0x800, scoped, tag = 'scratch operand']
  %s0 = inlined_call_operand.vmem [shape: f32[24,128], index: 0, kind: input, shape index: {}]
  %s1 = inlined_call_operand.vmem [shape: f32[24,128], index: 1, kind: input, shape index: {}]
  %s2 = inlined_call_operand.vmem [shape: f32[25,4,128], index: 2, kind: input, shape index: {}]
  %s3 = inlined_call_operand.vmem [shape: f32[24,128], index: 3, kind: output, shape index: {0}]
  %s4 = inlined_call_operand.vmem [shape: f32[24,128], index: 4, kind: output, shape index: {1}]
  %s5 = inlined_call_operand.vmem [shape: f32[24,128], index: 5, kind: output, shape index: {2}]
  %s6 = inlined_call_operand.vmem [shape: f32[24,128], index: 6, kind: output, shape index: {3}]
  %7 = xla_tuple %s3, %s4, %s5, %s6
  %s8 = sld [smem:[#allocation0]]
  $region57: #{sacsma_forward.2} parent=0
    _
  %s10 = ssub.s32 1, %s8
  %s11 = scalar_select 0, %s10, %s8
  // Predicated region
  $region2: #{sacsma_forward.2} parent=0 // pred_check
    _
  $region3: #{sacsma_forward.2} parent=0 // pred_check_branch
    %13 = sbr.rel (0) target = $region5
  $region4: #{sacsma_forward.2} parent=0 // pred_region
    _
  $region5: #{sacsma_forward.2} parent=0 // pred_fallthru
    _
  // Predicated region
  $region6: #{sacsma_forward.2} parent=0 // pred_check
    _
  $region7: #{sacsma_forward.2} parent=0 // pred_check_branch
    %15 = sbr.rel (0) target = $region9
  $region8: #{sacsma_forward.2} parent=0 // pred_region
    _
  $region9: #{sacsma_forward.2} parent=0 // pred_fallthru
    _
  // Predicated region
  $region10: #{sacsma_forward.2} parent=0 // pred_check
    _
  $region11: #{sacsma_forward.2} parent=0 // pred_check_branch
    %17 = sbr.rel (0) target = $region13
  $region12: #{sacsma_forward.2} parent=0 // pred_region
    _
  $region13: #{sacsma_forward.2} parent=0 // pred_fallthru
    _
  %p18 = scmp.eq.s32.totalorder 0, 0
  // Predicated region
  $region14: #{sacsma_forward.2} parent=0 // pred_check
    %p19 = pneg %p18
  $region15: #{sacsma_forward.2} parent=0 // pred_check_branch
    %21 = sbr.rel (%p19) target = $region17
  $region16: #{sacsma_forward.2} parent=0 // pred_region
    %22 = vst [vmem:[#allocation2] sm:$0xf] 0.0001
    %23 = vst [vmem:[#allocation3] sm:$0xf] 0.0001
    %24 = vst [vmem:[#allocation4] sm:$0xf] 0.0001
    %25 = vst [vmem:[#allocation5] sm:$0xf] 0.0001
    %26 = vst [vmem:[#allocation6] sm:$0xf] 0.0001
  $region17: #{sacsma_forward.2} parent=0 // pred_fallthru
    _
  %v27 = vld [vmem:[%s2] sm:$0xf]
  %s28 = scalar_lea.vmem %s2, 4
  %v29 = vld [vmem:[%s28] sm:$0xf]
  %s30 = scalar_lea.vmem %s2, 8
  %v31 = vld [vmem:[%s30] sm:$0xf]
  %s32 = scalar_lea.vmem %s2, 12
  %v33 = vld [vmem:[%s32] sm:$0xf]
  %s34 = scalar_lea.vmem %s2, 16
  %v35 = vld [vmem:[%s34] sm:$0xf]
  %s36 = scalar_lea.vmem %s2, 20
  %v37 = vld [vmem:[%s36] sm:$0xf]
  %s38 = scalar_lea.vmem %s2, 24
  %v39 = vld [vmem:[%s38] sm:$0xf]
  %s40 = scalar_lea.vmem %s2, 28
  %v41 = vld [vmem:[%s40] sm:$0xf]
  %s42 = scalar_lea.vmem %s2, 32
  %v43 = vld [vmem:[%s42] sm:$0xf]
  %s44 = scalar_lea.vmem %s2, 36
  %v45 = vld [vmem:[%s44] sm:$0xf]
  %s46 = scalar_lea.vmem %s2, 40
  %v47 = vld [vmem:[%s46] sm:$0xf]
  %s48 = scalar_lea.vmem %s2, 44
  %v49 = vld [vmem:[%s48] sm:$0xf]
  %s50 = scalar_lea.vmem %s2, 48
  %v51 = vld [vmem:[%s50] sm:$0xf]
  %s52 = scalar_lea.vmem %s2, 52
  %v53 = vld [vmem:[%s52] sm:$0xf]
  %s54 = scalar_lea.vmem %s2, 56
  %v55 = vld [vmem:[%s54] sm:$0xf]
  %s56 = scalar_lea.vmem %s2, 60
  %v57 = vld [vmem:[%s56] sm:$0xf]
  %s58 = scalar_lea.vmem %s2, 64
  %v59 = vld [vmem:[%s58] sm:$0xf]
  %s60 = scalar_lea.vmem %s2, 68
  %v61 = vld [vmem:[%s60] sm:$0xf]
  %s62 = scalar_lea.vmem %s2, 72
  %v63 = vld [vmem:[%s62] sm:$0xf]
  %s64 = scalar_lea.vmem %s2, 76
  %v65 = vld [vmem:[%s64] sm:$0xf]
  %s66 = scalar_lea.vmem %s2, 80
  %v67 = vld [vmem:[%s66] sm:$0xf]
  %s68 = scalar_lea.vmem %s2, 84
  %v69 = vld [vmem:[%s68] sm:$0xf]
  %s70 = scalar_lea.vmem %s2, 88
  %v71 = vld [vmem:[%s70] sm:$0xf]
  %s72 = scalar_lea.vmem %s2, 92
  %v73 = vld [vmem:[%s72] sm:$0xf]
  %s74 = scalar_lea.vmem %s2, 96
  %v75 = vld [vmem:[%s74] sm:$0xf]
  loop: start=0, step=1, limit=24
  $region18: #{sacsma_forward.2} parent=0 // loop_pre_header
    _
  $region19: #{sacsma_forward.2} parent=0 // loop_header
    %s77 = sphi 0, %s81
    %p78 = scmp.ge.s32.totalorder %s77, 24
  $region20: #{sacsma_forward.2} parent=0 // loop_header_branch
    %80 = sbr.rel (%p78) target = $region24
  $region21: #{sacsma_forward.2} parent=0 // loop_body
    %s82 = scalar_lea.vmem %s0, %s77
    %v83 = vld [vmem:[%s82] sm:$0x1]
    %s84 = scalar_lea.vmem %s1, %s77
    %v85 = vld [vmem:[%s84] sm:$0x1]
    %v86 = vld [vmem:[#allocation2] sm:$0xf]
    %v87 = vld [vmem:[#allocation3] sm:$0xf]
    %v88 = vld [vmem:[#allocation4] sm:$0xf]
    %v89 = vld [vmem:[#allocation5] sm:$0xf]
    %v90 = vld [vmem:[#allocation6] sm:$0xf]
    %v91 = vlaneseq
    %v92 = vshrl.u32 %v91, 7
    %v93 = vsub.s32 0, %v92
    %v94 = vrot.slane %v83, %v93
    %v95 = vmul.f32 %v27, %v94
    %v96 = vsub.f32 1.0, %v27
    %v97 = vmul.f32 %v96, %v94
    %v98 = vadd.f32 %v86, %v97
    %v99 = vmul.f32 %v98, %v53
    %v100 = vmul.f32 %v87, %v55
    %vm101 = vcmp.lt.f32.partialorder %v99, %v100
    %v102 = vmul.f32 %v29, %v87
    %v103 = vmul.f32 %v31, %v98
    %v104 = vsub.f32 %v102, %v103
    %v105 = vmul.f32 %v104, %v57
    %v106 = vsel %vm101, %v105, 0.0
    %v107 = vmin.f32 %v106, %v87
    %v108 = vsub.f32 %v87, %v107
    %v109 = vmax.f32 %v108, 0.0001
    %v110 = vadd.f32 %v98, %v107
    %v111 = vsub.f32 %v110, %v29
    %v112 = vmax.f32 %v111, 0.0
    %v113 = vsub.f32 %v110, %v112
    %v114 = vmax.f32 %v113, 0.0001
    %v115 = vlaneseq
    %v116 = vshrl.u32 %v115, 7
    %v117 = vsub.s32 0, %v116
    %v118 = vrot.slane %v85, %v117
    %v119 = vmul.f32 %v118, %v114
    %v120 = vmul.f32 %v119, %v59
    %v121 = vmin.f32 %v120, %v114
    %v122 = vsub.f32 %v114, %v121
    %v123 = vmax.f32 %v122, 0.0001
    %v124 = vadd.f32 %v109, %v112
    %v125 = vsub.f32 %v124, %v31
    %v126 = vmax.f32 %v125, 0.0
    %v127 = vsub.f32 %v124, %v126
    %v128 = vmax.f32 %v127, 0.0001
    %v129 = vmul.f32 %v33, %v128
    %v130 = vsub.f32 %v128, %v129
    %v131 = vmax.f32 %v130, 0.0001
    %v132 = vsub.f32 %v41, %v88
    %v133 = vsub.f32 %v43, %v89
    %v134 = vadd.f32 %v132, %v133
    %v135 = vsub.f32 %v45, %v90
    %v136 = vadd.f32 %v134, %v135
    %v137 = vmax.f32 %v136, 0.0
    %v138 = vmul.f32 %v137, %v73
    %vm139 = vcmp.gt.f32.partialorder %v138, 0.0
    %v140 = vmax.f32 %v138, 1e-30
    %v141 = vlog2.pop %v140
    %v142 = vmul.f32 %v141, 0.6931472
    %v143 = vmul.f32 %v39, %v142
    %v144 = vmul.f32 %v143, 1.442695
    %v145 = vpow.pop %v144
    %v146 = vsel %vm139, %v145, 0.0
    %v147 = vmul.f32 %v37, %v146
    %v148 = vadd.f32 %v147, 1.0
    %v149 = vmul.f32 %v35, %v148
    %v150 = vmul.f32 %v149, %v131
    %v151 = vmul.f32 %v150, %v55
    %v152 = vmin.f32 %v151, %v131
    %v153 = vsub.f32 %v131, %v152
    %v154 = vmax.f32 %v153, 0.0001
    %v155 = vsub.f32 %v118, %v121
    %v156 = vmax.f32 %v155, 0.0
    %v157 = vmin.f32 %v156, %v154
    %v158 = vsub.f32 %v154, %v157
    %v159 = vmax.f32 %v158, 0.0001
    %v160 = vsub.f32 0.0, %v88
    %v161 = vmul.f32 %v160, %v67
    %v162 = vadd.f32 %v89, %v90
    %v163 = vmul.f32 %v41, %v162
    %v164 = vadd.f32 %v161, %v163
    %v165 = vmul.f32 %v164, %v71
    %v166 = vmul.f32 %v88, %v61
    %v167 = vmul.f32 %v162, %v69
    %vm168 = vcmp.lt.f32.partialorder %v166, %v167
    %v169 = vmul.f32 %v43, %v165
    %v170 = vsel %vm168, %v169, 0.0
    %v171 = vmin.f32 %v170, %v89
    %v172 = vsub.f32 %v89, %v171
    %v173 = vmax.f32 %v172, 0.0001
    %v174 = vadd.f32 %v88, %v171
    %v175 = vmul.f32 %v174, %v61
    %v176 = vadd.f32 %v173, %v90
    %v177 = vmul.f32 %v176, %v69
    %vm178 = vcmp.lt.f32.partialorder %v175, %v177
    %v179 = vmul.f32 %v45, %v165
    %v180 = vsel %vm178, %v179, 0.0
    %v181 = vmin.f32 %v180, %v90
    %v182 = vsub.f32 %v90, %v181
    %v183 = vmax.f32 %v182, 0.0001
    %v184 = vadd.f32 %v174, %v181
    %v185 = vsub.f32 1.0, %v47
    %v186 = vmul.f32 %v185, %v152
    %v187 = vmul.f32 %v47, %v152
    %v188 = vadd.f32 %v184, %v186
    %v189 = vsub.f32 %v188, %v41
    %v190 = vmax.f32 %v189, 0.0
    %v191 = vsub.f32 %v188, %v190
    %v192 = vmax.f32 %v191, 0.0001
    %vm193 = vcmp.gt.f32.partialorder %v192, 0.0
    %v194 = vadd.f32 %v121, %v157
    %vm195 = vcmp.gt.f32.partialorder %v118, %v194
    %vm196 = vmand %vm193, %vm195
    %v197 = vsub.f32 %v155, %v157
    %v198 = vmul.f32 %v197, %v192
    %v199 = vmul.f32 %v198, %v75
    %v200 = vsel %vm196, %v199, 0.0
    %v201 = vmin.f32 %v200, %v192
    %v202 = vsub.f32 %v192, %v201
    %v203 = vmax.f32 %v202, 0.0001
    %v204 = vsub.f32 %v43, %v173
    %v205 = vmul.f32 %v204, %v63
    %v206 = vsub.f32 %v45, %v183
    %v207 = vmul.f32 %v206, %v65
    %v208 = vadd.f32 %v205, %v207
    %v209 = vadd.f32 %v208, 0.0001
    %v210 = vrcp.pop %v209
    %v211 = vmul.f32 %v205, %v210
    %v212 = vmul.f32 %v211, %v187
    %v213 = vmul.f32 %v211, %v190
    %v214 = vadd.f32 %v173, %v212
    %v215 = vadd.f32 %v214, %v213
    %v216 = vmul.f32 %v49, %v215
    %v217 = vsub.f32 %v215, %v216
    %v218 = vmax.f32 %v217, 0.0001
    %v219 = vsub.f32 %v218, %v43
    %v220 = vmax.f32 %v219, 0.0
    %v221 = vsub.f32 %v218, %v220
    %v222 = vmax.f32 %v221, 0.0001
    %vm223 = vcmp.ge.f32.partialorder %v222, %v43
    %v224 = vsub.f32 %v43, 0.0001
    %v225 = vsel %vm223, %v224, %v222
    %v226 = vadd.f32 %v216, %v220
    %v227 = vsub.f32 %v187, %v212
    %v228 = vmax.f32 %v227, 0.0
    %v229 = vsub.f32 %v43, %v225
    %v230 = vmul.f32 %v229, %v63
    %v231 = vadd.f32 %v230, %v207
    %v232 = vadd.f32 %v231, 0.0001
    %v233 = vrcp.pop %v232
    %v234 = vmul.f32 %v207, %v233
    %v235 = vmul.f32 %v234, %v190
    %v236 = vadd.f32 %v183, %v228
    %v237 = vadd.f32 %v236, %v235
    %v238 = vmul.f32 %v51, %v237
    %v239 = vsub.f32 %v237, %v238
    %v240 = vmax.f32 %v239, 0.0001
    %v241 = vsub.f32 %v240, %v45
    %v242 = vmax.f32 %v241, 0.0
    %v243 = vsub.f32 %v240, %v242
    %v244 = vmax.f32 %v243, 0.0001
    %vm245 = vcmp.ge.f32.partialorder %v244, %v45
    %v246 = vsub.f32 %v45, 0.0001
    %v247 = vsel %vm245, %v246, %v244
    %v248 = vadd.f32 %v238, %v242
    %v249 = vadd.f32 %v95, %v126
    %v250 = vadd.f32 %v226, %v248
    %v251 = vadd.f32 %v194, %v201
    %252 = vst [vmem:[#allocation2] sm:$0xf] %v123
    %253 = vst [vmem:[#allocation3] sm:$0xf] %v159
    %254 = vst [vmem:[#allocation4] sm:$0xf] %v203
    %255 = vst [vmem:[#allocation5] sm:$0xf] %v225
    %256 = vst [vmem:[#allocation6] sm:$0xf] %v247
    %vm257 = vcmask 1043456
    %v258 = vsel %vm257, %v249, 0.0
    %v259 = vrot.slane %v258, 4
    %v260 = vadd.f32 %v258, %v259
    %v261 = vrot.slane %v260, 2
    %v262 = vadd.f32 %v260, %v261
    %v263 = vrot.slane %v262, 1
    %v264 = vadd.f32 %v262, %v263
    %v265 = vmul.f32 %v264, 0.25
    %s266 = scalar_lea.vmem %s3, %s77
    %267 = vst [vmem:[%s266] sm:$0x1] %v265
    %v268 = vsel %vm257, %v129, 0.0
    %v269 = vrot.slane %v268, 4
    %v270 = vadd.f32 %v268, %v269
    %v271 = vrot.slane %v270, 2
    %v272 = vadd.f32 %v270, %v271
    %v273 = vrot.slane %v272, 1
    %v274 = vadd.f32 %v272, %v273
    %v275 = vmul.f32 %v274, 0.25
    %s276 = scalar_lea.vmem %s4, %s77
    %277 = vst [vmem:[%s276] sm:$0x1] %v275
    %v278 = vsel %vm257, %v250, 0.0
    %v279 = vrot.slane %v278, 4
    %v280 = vadd.f32 %v278, %v279
    %v281 = vrot.slane %v280, 2
    %v282 = vadd.f32 %v280, %v281
    %v283 = vrot.slane %v282, 1
    %v284 = vadd.f32 %v282, %v283
    %v285 = vmul.f32 %v284, 0.25
    %s286 = scalar_lea.vmem %s5, %s77
    %287 = vst [vmem:[%s286] sm:$0x1] %v285
    %v288 = vsel %vm257, %v251, 0.0
    %v289 = vrot.slane %v288, 4
    %v290 = vadd.f32 %v288, %v289
    %v291 = vrot.slane %v290, 2
    %v292 = vadd.f32 %v290, %v291
    %v293 = vrot.slane %v292, 1
    %v294 = vadd.f32 %v292, %v293
    %v295 = vmul.f32 %v294, 0.25
    %s296 = scalar_lea.vmem %s6, %s77
    %297 = vst [vmem:[%s296] sm:$0x1] %v295
  $region22: #{sacsma_forward.2} parent=0 // loop_footer
    %s81 = sadd.s32 1, %s77
  $region23: #{sacsma_forward.2} parent=0 // loop_footer_branch
    %76 = sbr.rel target = $region19
  $region24: #{sacsma_forward.2} parent=0 // loop_exit
    _
  // Predicated region
  $region25: #{sacsma_forward.2} parent=0 // pred_check
    _
  $region26: #{sacsma_forward.2} parent=0 // pred_check_branch
    %299 = sbr.rel (0) target = $region28
  $region27: #{sacsma_forward.2} parent=0 // pred_region
    _
  $region28: #{sacsma_forward.2} parent=0 // pred_fallthru
    _
  // Predicated region
  $region29: #{sacsma_forward.2} parent=0 // pred_check
    _
  $region30: #{sacsma_forward.2} parent=0 // pred_check_branch
    %301 = sbr.rel (0) target = $region32
  $region31: #{sacsma_forward.2} parent=0 // pred_region
    _
  $region32: #{sacsma_forward.2} parent=0 // pred_fallthru
    _
  // Predicated region
  $region33: #{sacsma_forward.2} parent=0 // pred_check
    _
  $region34: #{sacsma_forward.2} parent=0 // pred_check_branch
    %303 = sbr.rel (0) target = $region36
  $region35: #{sacsma_forward.2} parent=0 // pred_region
    _
  $region36: #{sacsma_forward.2} parent=0 // pred_fallthru
    _
  // Predicated region
  $region37: #{sacsma_forward.2} parent=0 // pred_check
    _
  $region38: #{sacsma_forward.2} parent=0 // pred_check_branch
    %305 = sbr.rel (0) target = $region40
  $region39: #{sacsma_forward.2} parent=0 // pred_region
    _
  $region40: #{sacsma_forward.2} parent=0 // pred_fallthru
    _
  // Predicated region
  $region41: #{sacsma_forward.2} parent=0 // pred_check
    _
  $region42: #{sacsma_forward.2} parent=0 // pred_check_branch
    %307 = sbr.rel (0) target = $region44
  $region43: #{sacsma_forward.2} parent=0 // pred_region
    _
  $region44: #{sacsma_forward.2} parent=0 // pred_fallthru
    _
  // Predicated region
  $region45: #{sacsma_forward.2} parent=0 // pred_check
    _
  $region46: #{sacsma_forward.2} parent=0 // pred_check_branch
    %309 = sbr.rel (0) target = $region48
  $region47: #{sacsma_forward.2} parent=0 // pred_region
    _
  $region48: #{sacsma_forward.2} parent=0 // pred_fallthru
    _
  // Predicated region
  $region49: #{sacsma_forward.2} parent=0 // pred_check
    _
  $region50: #{sacsma_forward.2} parent=0 // pred_check_branch
    %311 = sbr.rel (0) target = $region52
  $region51: #{sacsma_forward.2} parent=0 // pred_region
    _
  $region52: #{sacsma_forward.2} parent=0 // pred_fallthru
    _
  // Predicated region
  $region53: #{sacsma_forward.2} parent=0 // pred_check
    _
  $region54: #{sacsma_forward.2} parent=0 // pred_check_branch
    %313 = sbr.rel (0) target = $region56
  $region55: #{sacsma_forward.2} parent=0 // pred_region
    _
  $region56: #{sacsma_forward.2} parent=0 // pred_fallthru
    _

</llo_original>
